<compile_context>
chip_gen: v6e
topology: v6e:2x2x1
jax: 0.10.0
libtpu: 0.0.40
codegen_flags: <defaults>
</compile_context>

<pallas_src>
import numpy as np
import jax
import jax.numpy as jnp
from jax.experimental import pallas as pl
from jax.experimental.pallas import tpu as pltpu

# ---------------- model sizes (small, consistent with the module) -----------
VOCAB_SIZE = 50
VOCAB_PAD = 128          # pad vocab dim to one full lane group (unmasked vst)
EMBED_SIZE = 32
HIDDEN_SIZE = 32
NUM_LAYERS = 2
BATCH = 4
BATCH_PAD = 8            # pad batch to a full sublane group
CAP_LEN = 8              # caption length T ; LSTM sees T+1 steps
T1 = CAP_LEN + 1

E = EMBED_SIZE
H = HIDDEN_SIZE
BP = BATCH_PAD

# row layout of the packed (rows, 128) weight slab
_ROW_WIH0 = 0                 # rows [0, 32)  : W_ih layer 0   (E, 4H)
_ROW_WLIN = E                 # rows [32, 64) : linear weight  (H, VOCAB_PAD)
_ROW_BIAS = E + H             # rows [64, 72) : bias tile (row0=b0, row1=b1, row2=b_lin)
SLAB_ROWS = _ROW_BIAS + 8     # 72


# ---------------- fused decoder kernel --------------------------------------
def fused_decoder_kernel(x_ref, w_slab_ref, w_big_ref, out_ref,
                         g_scr, hid_scr):
    """x_ref: (T1*BP, E) time-major rows.  out_ref: (T1*BP, VOCAB_PAD)."""
    # Static weight slices, loaded once (all off the recurrent critical path).
    w_ih0 = w_slab_ref[_ROW_WIH0:_ROW_WIH0 + E, :]      # (E, 4H)
    w_lin = w_slab_ref[_ROW_WLIN:_ROW_WLIN + H, :]      # (H, VOCAB_PAD)
    btile = w_slab_ref[_ROW_BIAS:_ROW_BIAS + 8, :]      # aligned (8,128) tile
    b0 = btile[0:1, :]                                  # combined LSTM bias, layer 0
    b1 = btile[1:2, :]                                  # combined LSTM bias, layer 1
    b_lin = btile[2:3, :]
    w_big = w_big_ref[...]                              # (2H, 8H) fused recurrent RHS

    # Bulk layer-0 input projection (+ bias): one matmul, off the serial path.
    g_scr[...] = (jnp.dot(x_ref[...], w_ih0,
                          preferred_element_type=jnp.float32) + b0)

    def lstm_cell(gates, c_prev):
        sig = jax.nn.sigmoid(gates)          # full-vreg EUP pass
        th = jnp.tanh(gates)                 # full-vreg EUP pass
        i = sig[:, 0:H]                      # PyTorch gate order i, f, g, o
        f = sig[:, H:2 * H]
        g = th[:, 2 * H:3 * H]
        o = sig[:, 3 * H:4 * H]
        c = f * c_prev + i * g
        h = o * jnp.tanh(c)
        return h, c

    h0 = jnp.zeros((BP, H), jnp.float32)
    c0 = jnp.zeros((BP, H), jnp.float32)
    h1 = jnp.zeros((BP, H), jnp.float32)
    c1 = jnp.zeros((BP, H), jnp.float32)

    # Wavefront over the two layers (fully unrolled; carries live in vregs).
    # Step s computes layer-0 time s and layer-1 time s-1 with ONE fused
    # recurrent matmul: [h0, h1] @ [[W_hh0, W_ih1], [0, W_hh1]].
    for s in range(T1 + 1):
        if s == 0:
            # h0 == h1 == 0 -> the recurrent matmul would be zero; skip it.
            gates0 = g_scr[pl.ds(0, BP), :]
            h0, c0 = lstm_cell(gates0, c0)
        else:
            hcat = jnp.concatenate([h0, h1], axis=1)                 # (BP, 2H)
            big = jnp.dot(hcat, w_big,
                          preferred_element_type=jnp.float32)        # (BP, 8H)
            if s < T1:                                               # layer-0, time s
                gates0 = g_scr[pl.ds(s * BP, BP), :] + big[:, 0:4 * H]
                h0, c0 = lstm_cell(gates0, c0)
            # layer-1, time s-1: its input h0[s-1] and recurrent h1[s-2] are
            # both folded into `big` (computed from the pre-update carries).
            gates1 = big[:, 4 * H:8 * H] + b1
            h1, c1 = lstm_cell(gates1, c1)
            hid_scr[pl.ds((s - 1) * BP, BP), :] = h1                 # aligned (8,H) store

    # Fused, lane-dense output projection over all T1*BP rows at once.
    out_ref[...] = (jnp.dot(hid_scr[...], w_lin,
                            preferred_element_type=jnp.float32) + b_lin)


def fused_decoder(x_flat, w_slab, w_big):
    """x_flat: (T1*BP, E) time-major.  Returns (T1*BP, VOCAB_PAD) logits."""
    T1B = x_flat.shape[0]
    assert T1B == T1 * BP

    def full2d(shape):
        return pl.BlockSpec(shape, lambda i: (0, 0))

    return pl.pallas_call(
        fused_decoder_kernel,
        out_shape=jax.ShapeDtypeStruct((T1B, VOCAB_PAD), jnp.float32),
        grid=(1,),
        in_specs=[
            full2d((T1B, E)),
            full2d((SLAB_ROWS, VOCAB_PAD)),
            full2d((2 * H, 8 * H)),
        ],
        out_specs=full2d((T1B, VOCAB_PAD)),
        scratch_shapes=[
            pltpu.VMEM((T1B, 4 * H), jnp.float32),   # bulk layer-0 gate inputs
            pltpu.VMEM((T1B, H), jnp.float32),       # layer-1 hidden outputs
        ],
        compiler_params=pltpu.CompilerParams(
            dimension_semantics=("arbitrary",)),
    )(x_flat, w_slab, w_big)


# ---------------- parameter init (deterministic, PyTorch-shaped) ------------
def init_params(key):
    assert NUM_LAYERS == 2, "fused kernel is built for 2 layers"
    keys = jax.random.split(key, 3 + 3 * NUM_LAYERS)
    s = 1.0 / np.sqrt(HIDDEN_SIZE)

    w_lin = jax.random.uniform(keys[1], (HIDDEN_SIZE, VOCAB_SIZE),
                               jnp.float32, -s, s)
    b_lin = jax.random.uniform(keys[2], (1, VOCAB_SIZE), jnp.float32, -s, s)

    params = {
        "embed": jax.random.normal(keys[0], (VOCAB_SIZE, EMBED_SIZE),
                                   jnp.float32),
        # nn.Linear(hidden, vocab): stored transposed (H, V) and lane-padded
        # to 128 columns so the kernel's output store is unmasked.
        "w_lin": jnp.pad(w_lin, ((0, 0), (0, VOCAB_PAD - VOCAB_SIZE))),
        "b_lin": jnp.pad(b_lin, ((0, 0), (0, VOCAB_PAD - VOCAB_SIZE))),
        "w_ih": [], "w_hh": [], "bias": [],
    }
    for l in range(NUM_LAYERS):
        in_size = EMBED_SIZE if l == 0 else HIDDEN_SIZE
        k0, k1, k2 = keys[3 + 3 * l], keys[4 + 3 * l], keys[5 + 3 * l]
        params["w_ih"].append(
            jax.random.uniform(k0, (in_size, 4 * HIDDEN_SIZE),
                               jnp.float32, -s, s))
        params["w_hh"].append(
            jax.random.uniform(k1, (HIDDEN_SIZE, 4 * HIDDEN_SIZE),
                               jnp.float32, -s, s))
        # combined b_ih + b_hh
        params["bias"].append(
            jax.random.uniform(k2, (1, 4 * HIDDEN_SIZE),
                               jnp.float32, -s, s))
    return params


def pack_for_kernel(params):
    """Collapse the 8 small weight/bias tensors into two lane-dense slabs."""
    H4 = 4 * HIDDEN_SIZE
    assert H4 == VOCAB_PAD  # 128-wide slab holds both gate blocks and logits

    w_slab = jnp.zeros((SLAB_ROWS, VOCAB_PAD), jnp.float32)
    w_slab = w_slab.at[_ROW_WIH0:_ROW_WIH0 + EMBED_SIZE, :H4].set(
        params["w_ih"][0])
    w_slab = w_slab.at[_ROW_WLIN:_ROW_WLIN + HIDDEN_SIZE, :].set(
        params["w_lin"])
    w_slab = w_slab.at[_ROW_BIAS + 0, :H4].set(params["bias"][0][0])
    w_slab = w_slab.at[_ROW_BIAS + 1, :H4].set(params["bias"][1][0])
    w_slab = w_slab.at[_ROW_BIAS + 2, :].set(params["b_lin"][0])

    # Fused block recurrent RHS: [[W_hh0, W_ih1], [0, W_hh1]]  -> (2H, 8H)
    w_big = jnp.zeros((2 * HIDDEN_SIZE, 8 * HIDDEN_SIZE), jnp.float32)
    w_big = w_big.at[:HIDDEN_SIZE, :H4].set(params["w_hh"][0])
    w_big = w_big.at[:HIDDEN_SIZE, H4:].set(params["w_ih"][1])
    w_big = w_big.at[HIDDEN_SIZE:, H4:].set(params["w_hh"][1])
    return w_slab, w_big


# ---------------- pack_padded_sequence index order (host glue) --------------
def packed_indices(lengths):
    # lengths must be sorted descending (PyTorch enforce_sorted=True default)
    assert list(lengths) == sorted(lengths, reverse=True)
    b_idx, t_idx = [], []
    for t in range(max(lengths)):
        for b, L in enumerate(lengths):
            if L > t:
                b_idx.append(b)
                t_idx.append(t)
    return np.array(b_idx, np.int32), np.array(t_idx, np.int32)


# ---------------- full forward pass ------------------------------------------
def rnn_decoder_forward(params, features, captions, lengths):
    B = features.shape[0]
    # time-major embedding gather: no (B,T,E)->(T,B,E) activation transpose
    emb_tm = params["embed"][captions.T]                          # (T, B, E)
    seq_tm = jnp.concatenate([features[None, :, :], emb_tm], 0)   # (T+1, B, E)
    # zero-pad batch 4 -> 8 so every per-step tile access is sublane-aligned;
    # padded rows are finite and excluded by the packed-index gather below.
    seq_pad = jnp.pad(seq_tm, ((0, 0), (0, BP - B), (0, 0)))
    x_flat = seq_pad.reshape(T1 * BP, EMBED_SIZE).astype(jnp.float32)

    w_slab, w_big = pack_for_kernel(params)
    logits_full = fused_decoder(x_flat, w_slab, w_big)            # (T1*BP, 128)

    # packed (sum(lengths), V) in pack_padded_sequence data order, gathered
    # AFTER the projection, then sliced back to the real vocab size.
    b_idx, t_idx = packed_indices(lengths)
    flat_idx = jnp.asarray(t_idx * BP + b_idx)
    return logits_full[flat_idx][:, :VOCAB_SIZE]


# ---------------- pure-JAX reference for validation --------------------------
def ref_forward(params, features, captions, lengths):
    emb = params["embed"][captions]
    x = jnp.concatenate([features[:, None, :], emb], 1)
    B, T1_, _ = x.shape
    for l in range(NUM_LAYERS):
        h = jnp.zeros((B, H)); c = jnp.zeros((B, H))
        outs = []
        for t in range(T1_):
            gates = (x[:, t] @ params["w_ih"][l] + h @ params["w_hh"][l]
                     + params["bias"][l])
            i = jax.nn.sigmoid(gates[:, :H])
            f = jax.nn.sigmoid(gates[:, H:2 * H])
            g = jnp.tanh(gates[:, 2 * H:3 * H])
            o = jax.nn.sigmoid(gates[:, 3 * H:])
            c = f * c + i * g
            h = o * jnp.tanh(c)
            outs.append(h)
        x = jnp.stack(outs, 1)
    b_idx, t_idx = packed_indices(lengths)
    packed = x[jnp.asarray(b_idx), jnp.asarray(t_idx)]
    return (packed @ params["w_lin"][:, :VOCAB_SIZE]
            + params["b_lin"][:, :VOCAB_SIZE])


# TODO(synk): the greedy `sample()` loop (argmax + embedding feedback) is a
# host-level decode loop, not a kernel hot path; not implemented here.

if __name__ == "__main__":
    key = jax.random.PRNGKey(0)
    kp, kf, kc = jax.random.split(key, 3)

    params = init_params(kp)
    features = jax.random.normal(kf, (BATCH, EMBED_SIZE), jnp.float32)
    captions = jax.random.randint(kc, (BATCH, CAP_LEN), 0, VOCAB_SIZE,
                                  jnp.int32)
    lengths = [CAP_LEN + 1, 7, 5, 3]          # sorted descending, <= T+1

    out = rnn_decoder_forward(params, features, captions, lengths)
    out = jax.block_until_ready(out)

    ref = ref_forward(params, features, captions, lengths)
    assert out.shape == (sum(lengths), VOCAB_SIZE)
    np.testing.assert_allclose(np.asarray(out), np.asarray(ref),
                               rtol=2e-5, atol=2e-5)
    print("KERNEL_OK")
</pallas_src>

<mosaic_0001>
module attributes {stable_mosaic.version = 11 : i64} {
  func.func @fused_decoder_kernel(%arg0: i32, %arg1: memref<72x32xf32, #tpu.memory_space<vmem>>, %arg2: memref<72x128xf32, #tpu.memory_space<vmem>>, %arg3: memref<64x256xf32, #tpu.memory_space<vmem>>, %arg4: memref<72x128xf32, #tpu.memory_space<vmem>>, %arg5: memref<72x128xf32, #tpu.memory_space<vmem>>, %arg6: memref<72x32xf32, #tpu.memory_space<vmem>>) attributes {dimension_semantics = [#tpu.dimension_semantics<arbitrary>], iteration_bounds = array<i64: 1>, scalar_prefetch = 0 : i64, scratch_operands = 2 : i64, tpu.core_type = #tpu.core_type<tc>, window_params = [{pipeline_mode = #tpu.pipeline_mode<synchronous>, transform_indices = @transform_0, window_bounds = array<i64: 72, 32>}, {pipeline_mode = #tpu.pipeline_mode<synchronous>, transform_indices = @transform_1, window_bounds = array<i64: 72, 128>}, {pipeline_mode = #tpu.pipeline_mode<synchronous>, transform_indices = @transform_2, window_bounds = array<i64: 64, 256>}, {pipeline_mode = #tpu.pipeline_mode<synchronous>, transform_indices = @transform_3, window_bounds = array<i64: 72, 128>}]} {
    %c0 = arith.constant 0 : index
    %c0_0 = arith.constant 0 : index
    %0 = vector.load %arg2[%c0, %c0_0] : memref<72x128xf32, #tpu.memory_space<vmem>>, vector<32x128xf32>
    %c32 = arith.constant 32 : index
    %c0_1 = arith.constant 0 : index
    %1 = vector.load %arg2[%c32, %c0_1] : memref<72x128xf32, #tpu.memory_space<vmem>>, vector<32x128xf32>
    %c64 = arith.constant 64 : index
    %c0_2 = arith.constant 0 : index
    %2 = vector.load %arg2[%c64, %c0_2] : memref<72x128xf32, #tpu.memory_space<vmem>>, vector<8x128xf32>
    %3 = vector.extract_strided_slice %2 {offsets = [0, 0], sizes = [1, 128], strides = [1, 1]} : vector<8x128xf32> to vector<1x128xf32>
    %4 = vector.extract_strided_slice %2 {offsets = [1, 0], sizes = [1, 128], strides = [1, 1]} : vector<8x128xf32> to vector<1x128xf32>
    %5 = vector.extract_strided_slice %2 {offsets = [2, 0], sizes = [1, 128], strides = [1, 1]} : vector<8x128xf32> to vector<1x128xf32>
    %c0_3 = arith.constant 0 : index
    %c0_4 = arith.constant 0 : index
    %6 = vector.load %arg3[%c0_3, %c0_4] : memref<64x256xf32, #tpu.memory_space<vmem>>, vector<64x256xf32>
    %c0_5 = arith.constant 0 : index
    %c0_6 = arith.constant 0 : index
    %7 = vector.load %arg1[%c0_5, %c0_6] : memref<72x32xf32, #tpu.memory_space<vmem>>, vector<72x32xf32>
    %cst = arith.constant dense<0.000000e+00> : vector<72x128xf32>
    %8 = tpu.matmul %7, %0, %cst {dimension_numbers = #tpu.dot_dimension_numbers<[1], [0], [0], [1], [0, 0, 1, 1], [], []>} : vector<72x32xf32>, vector<32x128xf32>, vector<72x128xf32> -> vector<72x128xf32>
    %9 = vector.broadcast %3 : vector<1x128xf32> to vector<72x128xf32>
    %10 = arith.addf %8, %9 : vector<72x128xf32>
    %c0_7 = arith.constant 0 : index
    %c0_8 = arith.constant 0 : index
    %11 = vector.load %arg5[%c0_7, %c0_8] : memref<72x128xf32, #tpu.memory_space<vmem>>, vector<72x128xf32>
    tpu.vector_store %arg5[%c0_7, %c0_8], %10 {strides = array<i32>} : memref<72x128xf32, #tpu.memory_space<vmem>>, vector<72x128xf32>,
    %cst_9 = arith.constant 0.000000e+00 : f32
    %12 = vector.broadcast %cst_9 : f32 to vector<8x32xf32>
    %cst_10 = arith.constant 0.000000e+00 : f32
    %13 = vector.broadcast %cst_10 : f32 to vector<8x32xf32>
    %cst_11 = arith.constant 0.000000e+00 : f32
    %14 = vector.broadcast %cst_11 : f32 to vector<8x32xf32>
    %c0_12 = arith.constant 0 : index
    %c0_13 = arith.constant 0 : index
    %15 = vector.load %arg5[%c0_12, %c0_13] : memref<72x128xf32, #tpu.memory_space<vmem>>, vector<8x128xf32>
    %16 = arith.negf %15 : vector<8x128xf32>
    %17 = math.exp %16 : vector<8x128xf32>
    %cst_14 = arith.constant 1.000000e+00 : f32
    %18 = vector.broadcast %cst_14 : f32 to vector<8x128xf32>
    %19 = arith.addf %18, %17 : vector<8x128xf32>
    %20 = arith.divf %18, %19 : vector<8x128xf32>
    %21 = math.tanh %15 : vector<8x128xf32>
    %22 = vector.extract_strided_slice %20 {offsets = [0, 0], sizes = [8, 32], strides = [1, 1]} : vector<8x128xf32> to vector<8x32xf32>
    %23 = vector.extract_strided_slice %20 {offsets = [0, 32], sizes = [8, 32], strides = [1, 1]} : vector<8x128xf32> to vector<8x32xf32>
    %24 = vector.extract_strided_slice %21 {offsets = [0, 64], sizes = [8, 32], strides = [1, 1]} : vector<8x128xf32> to vector<8x32xf32>
    %25 = vector.extract_strided_slice %20 {offsets = [0, 96], sizes = [8, 32], strides = [1, 1]} : vector<8x128xf32> to vector<8x32xf32>
    %26 = arith.mulf %23, %12 : vector<8x32xf32>
    %27 = arith.mulf %22, %24 : vector<8x32xf32>
    %28 = arith.addf %26, %27 : vector<8x32xf32>
    %29 = math.tanh %28 : vector<8x32xf32>
    %30 = arith.mulf %25, %29 : vector<8x32xf32>
    %31 = tpu.concatenate %30, %13 in 1 : vector<8x32xf32>, vector<8x32xf32> -> vector<8x64xf32>
    %cst_15 = arith.constant dense<0.000000e+00> : vector<8x256xf32>
    %32 = tpu.matmul %31, %6, %cst_15 {dimension_numbers = #tpu.dot_dimension_numbers<[1], [0], [0], [1], [0, 0, 1, 1], [], []>} : vector<8x64xf32>, vector<64x256xf32>, vector<8x256xf32> -> vector<8x256xf32>
    %c8 = arith.constant 8 : index
    %c0_16 = arith.constant 0 : index
    %33 = vector.load %arg5[%c8, %c0_16] : memref<72x128xf32, #tpu.memory_space<vmem>>, vector<8x128xf32>
    %34 = vector.extract_strided_slice %32 {offsets = [0, 0], sizes = [8, 128], strides = [1, 1]} : vector<8x256xf32> to vector<8x128xf32>
    %35 = arith.addf %33, %34 : vector<8x128xf32>
    %36 = arith.negf %35 : vector<8x128xf32>
    %37 = math.exp %36 : vector<8x128xf32>
    %cst_17 = arith.constant 1.000000e+00 : f32
    %38 = vector.broadcast %cst_17 : f32 to vector<8x128xf32>
    %39 = arith.addf %38, %37 : vector<8x128xf32>
    %40 = arith.divf %38, %39 : vector<8x128xf32>
    %41 = math.tanh %35 : vector<8x128xf32>
    %42 = vector.extract_strided_slice %40 {offsets = [0, 0], sizes = [8, 32], strides = [1, 1]} : vector<8x128xf32> to vector<8x32xf32>
    %43 = vector.extract_strided_slice %40 {offsets = [0, 32], sizes = [8, 32], strides = [1, 1]} : vector<8x128xf32> to vector<8x32xf32>
    %44 = vector.extract_strided_slice %41 {offsets = [0, 64], sizes = [8, 32], strides = [1, 1]} : vector<8x128xf32> to vector<8x32xf32>
    %45 = vector.extract_strided_slice %40 {offsets = [0, 96], sizes = [8, 32], strides = [1, 1]} : vector<8x128xf32> to vector<8x32xf32>
    %46 = arith.mulf %43, %28 : vector<8x32xf32>
    %47 = arith.mulf %42, %44 : vector<8x32xf32>
    %48 = arith.addf %46, %47 : vector<8x32xf32>
    %49 = math.tanh %48 : vector<8x32xf32>
    %50 = arith.mulf %45, %49 : vector<8x32xf32>
    %51 = vector.extract_strided_slice %32 {offsets = [0, 128], sizes = [8, 128], strides = [1, 1]} : vector<8x256xf32> to vector<8x128xf32>
    %52 = vector.broadcast %4 : vector<1x128xf32> to vector<8x128xf32>
    %53 = arith.addf %51, %52 : vector<8x128xf32>
    %54 = arith.negf %53 : vector<8x128xf32>
    %55 = math.exp %54 : vector<8x128xf32>
    %cst_18 = arith.constant 1.000000e+00 : f32
    %56 = vector.broadcast %cst_18 : f32 to vector<8x128xf32>
    %57 = arith.addf %56, %55 : vector<8x128xf32>
    %58 = arith.divf %56, %57 : vector<8x128xf32>
    %59 = math.tanh %53 : vector<8x128xf32>
    %60 = vector.extract_strided_slice %58 {offsets = [0, 0], sizes = [8, 32], strides = [1, 1]} : vector<8x128xf32> to vector<8x32xf32>
    %61 = vector.extract_strided_slice %58 {offsets = [0, 32], sizes = [8, 32], strides = [1, 1]} : vector<8x128xf32> to vector<8x32xf32>
    %62 = vector.extract_strided_slice %59 {offsets = [0, 64], sizes = [8, 32], strides = [1, 1]} : vector<8x128xf32> to vector<8x32xf32>
    %63 = vector.extract_strided_slice %58 {offsets = [0, 96], sizes = [8, 32], strides = [1, 1]} : vector<8x128xf32> to vector<8x32xf32>
    %64 = arith.mulf %61, %14 : vector<8x32xf32>
    %65 = arith.mulf %60, %62 : vector<8x32xf32>
    %66 = arith.addf %64, %65 : vector<8x32xf32>
    %67 = math.tanh %66 : vector<8x32xf32>
    %68 = arith.mulf %63, %67 : vector<8x32xf32>
    %c0_19 = arith.constant 0 : index
    %c0_20 = arith.constant 0 : index
    %69 = vector.load %arg6[%c0_19, %c0_20] : memref<72x32xf32, #tpu.memory_space<vmem>>, vector<8x32xf32>
    tpu.vector_store %arg6[%c0_19, %c0_20], %68 {strides = array<i32>} : memref<72x32xf32, #tpu.memory_space<vmem>>, vector<8x32xf32>,
    %70 = tpu.concatenate %50, %68 in 1 : vector<8x32xf32>, vector<8x32xf32> -> vector<8x64xf32>
    %cst_21 = arith.constant dense<0.000000e+00> : vector<8x256xf32>
    %71 = tpu.matmul %70, %6, %cst_21 {dimension_numbers = #tpu.dot_dimension_numbers<[1], [0], [0], [1], [0, 0, 1, 1], [], []>} : vector<8x64xf32>, vector<64x256xf32>, vector<8x256xf32> -> vector<8x256xf32>
    %c16 = arith.constant 16 : index
    %c0_22 = arith.constant 0 : index
    %72 = vector.load %arg5[%c16, %c0_22] : memref<72x128xf32, #tpu.memory_space<vmem>>, vector<8x128xf32>
    %73 = vector.extract_strided_slice %71 {offsets = [0, 0], sizes = [8, 128], strides = [1, 1]} : vector<8x256xf32> to vector<8x128xf32>
    %74 = arith.addf %72, %73 : vector<8x128xf32>
    %75 = arith.negf %74 : vector<8x128xf32>
    %76 = math.exp %75 : vector<8x128xf32>
    %cst_23 = arith.constant 1.000000e+00 : f32
    %77 = vector.broadcast %cst_23 : f32 to vector<8x128xf32>
    %78 = arith.addf %77, %76 : vector<8x128xf32>
    %79 = arith.divf %77, %78 : vector<8x128xf32>
    %80 = math.tanh %74 : vector<8x128xf32>
    %81 = vector.extract_strided_slice %79 {offsets = [0, 0], sizes = [8, 32], strides = [1, 1]} : vector<8x128xf32> to vector<8x32xf32>
    %82 = vector.extract_strided_slice %79 {offsets = [0, 32], sizes = [8, 32], strides = [1, 1]} : vector<8x128xf32> to vector<8x32xf32>
    %83 = vector.extract_strided_slice %80 {offsets = [0, 64], sizes = [8, 32], strides = [1, 1]} : vector<8x128xf32> to vector<8x32xf32>
    %84 = vector.extract_strided_slice %79 {offsets = [0, 96], sizes = [8, 32], strides = [1, 1]} : vector<8x128xf32> to vector<8x32xf32>
    %85 = arith.mulf %82, %48 : vector<8x32xf32>
    %86 = arith.mulf %81, %83 : vector<8x32xf32>
    %87 = arith.addf %85, %86 : vector<8x32xf32>
    %88 = math.tanh %87 : vector<8x32xf32>
    %89 = arith.mulf %84, %88 : vector<8x32xf32>
    %90 = vector.extract_strided_slice %71 {offsets = [0, 128], sizes = [8, 128], strides = [1, 1]} : vector<8x256xf32> to vector<8x128xf32>
    %91 = vector.broadcast %4 : vector<1x128xf32> to vector<8x128xf32>
    %92 = arith.addf %90, %91 : vector<8x128xf32>
    %93 = arith.negf %92 : vector<8x128xf32>
    %94 = math.exp %93 : vector<8x128xf32>
    %cst_24 = arith.constant 1.000000e+00 : f32
    %95 = vector.broadcast %cst_24 : f32 to vector<8x128xf32>
    %96 = arith.addf %95, %94 : vector<8x128xf32>
    %97 = arith.divf %95, %96 : vector<8x128xf32>
    %98 = math.tanh %92 : vector<8x128xf32>
    %99 = vector.extract_strided_slice %97 {offsets = [0, 0], sizes = [8, 32], strides = [1, 1]} : vector<8x128xf32> to vector<8x32xf32>
    %100 = vector.extract_strided_slice %97 {offsets = [0, 32], sizes = [8, 32], strides = [1, 1]} : vector<8x128xf32> to vector<8x32xf32>
    %101 = vector.extract_strided_slice %98 {offsets = [0, 64], sizes = [8, 32], strides = [1, 1]} : vector<8x128xf32> to vector<8x32xf32>
    %102 = vector.extract_strided_slice %97 {offsets = [0, 96], sizes = [8, 32], strides = [1, 1]} : vector<8x128xf32> to vector<8x32xf32>
    %103 = arith.mulf %100, %66 : vector<8x32xf32>
    %104 = arith.mulf %99, %101 : vector<8x32xf32>
    %105 = arith.addf %103, %104 : vector<8x32xf32>
    %106 = math.tanh %105 : vector<8x32xf32>
    %107 = arith.mulf %102, %106 : vector<8x32xf32>
    %c8_25 = arith.constant 8 : index
    %c0_26 = arith.constant 0 : index
    %108 = vector.load %arg6[%c8_25, %c0_26] : memref<72x32xf32, #tpu.memory_space<vmem>>, vector<8x32xf32>
    tpu.vector_store %arg6[%c8_25, %c0_26], %107 {strides = array<i32>} : memref<72x32xf32, #tpu.memory_space<vmem>>, vector<8x32xf32>,
    %109 = tpu.concatenate %89, %107 in 1 : vector<8x32xf32>, vector<8x32xf32> -> vector<8x64xf32>
    %cst_27 = arith.constant dense<0.000000e+00> : vector<8x256xf32>
    %110 = tpu.matmul %109, %6, %cst_27 {dimension_numbers = #tpu.dot_dimension_numbers<[1], [0], [0], [1], [0, 0, 1, 1], [], []>} : vector<8x64xf32>, vector<64x256xf32>, vector<8x256xf32> -> vector<8x256xf32>
    %c24 = arith.constant 24 : index
    %c0_28 = arith.constant 0 : index
    %111 = vector.load %arg5[%c24, %c0_28] : memref<72x128xf32, #tpu.memory_space<vmem>>, vector<8x128xf32>
    %112 = vector.extract_strided_slice %110 {offsets = [0, 0], sizes = [8, 128], strides = [1, 1]} : vector<8x256xf32> to vector<8x128xf32>
    %113 = arith.addf %111, %112 : vector<8x128xf32>
    %114 = arith.negf %113 : vector<8x128xf32>
    %115 = math.exp %114 : vector<8x128xf32>
    %cst_29 = arith.constant 1.000000e+00 : f32
    %116 = vector.broadcast %cst_29 : f32 to vector<8x128xf32>
    %117 = arith.addf %116, %115 : vector<8x128xf32>
    %118 = arith.divf %116, %117 : vector<8x128xf32>
    %119 = math.tanh %113 : vector<8x128xf32>
    %120 = vector.extract_strided_slice %118 {offsets = [0, 0], sizes = [8, 32], strides = [1, 1]} : vector<8x128xf32> to vector<8x32xf32>
    %121 = vector.extract_strided_slice %118 {offsets = [0, 32], sizes = [8, 32], strides = [1, 1]} : vector<8x128xf32> to vector<8x32xf32>
    %122 = vector.extract_strided_slice %119 {offsets = [0, 64], sizes = [8, 32], strides = [1, 1]} : vector<8x128xf32> to vector<8x32xf32>
    %123 = vector.extract_strided_slice %118 {offsets = [0, 96], sizes = [8, 32], strides = [1, 1]} : vector<8x128xf32> to vector<8x32xf32>
    %124 = arith.mulf %121, %87 : vector<8x32xf32>
    %125 = arith.mulf %120, %122 : vector<8x32xf32>
    %126 = arith.addf %124, %125 : vector<8x32xf32>
    %127 = math.tanh %126 : vector<8x32xf32>
    %128 = arith.mulf %123, %127 : vector<8x32xf32>
    %129 = vector.extract_strided_slice %110 {offsets = [0, 128], sizes = [8, 128], strides = [1, 1]} : vector<8x256xf32> to vector<8x128xf32>
    %130 = vector.broadcast %4 : vector<1x128xf32> to vector<8x128xf32>
    %131 = arith.addf %129, %130 : vector<8x128xf32>
    %132 = arith.negf %131 : vector<8x128xf32>
    %133 = math.exp %132 : vector<8x128xf32>
    %cst_30 = arith.constant 1.000000e+00 : f32
    %134 = vector.broadcast %cst_30 : f32 to vector<8x128xf32>
    %135 = arith.addf %134, %133 : vector<8x128xf32>
    %136 = arith.divf %134, %135 : vector<8x128xf32>
    %137 = math.tanh %131 : vector<8x128xf32>
    %138 = vector.extract_strided_slice %136 {offsets = [0, 0], sizes = [8, 32], strides = [1, 1]} : vector<8x128xf32> to vector<8x32xf32>
    %139 = vector.extract_strided_slice %136 {offsets = [0, 32], sizes = [8, 32], strides = [1, 1]} : vector<8x128xf32> to vector<8x32xf32>
    %140 = vector.extract_strided_slice %137 {offsets = [0, 64], sizes = [8, 32], strides = [1, 1]} : vector<8x128xf32> to vector<8x32xf32>
    %141 = vector.extract_strided_slice %136 {offsets = [0, 96], sizes = [8, 32], strides = [1, 1]} : vector<8x128xf32> to vector<8x32xf32>
    %142 = arith.mulf %139, %105 : vector<8x32xf32>
    %143 = arith.mulf %138, %140 : vector<8x32xf32>
    %144 = arith.addf %142, %143 : vector<8x32xf32>
    %145 = math.tanh %144 : vector<8x32xf32>
    %146 = arith.mulf %141, %145 : vector<8x32xf32>
    %c16_31 = arith.constant 16 : index
    %c0_32 = arith.constant 0 : index
    %147 = vector.load %arg6[%c16_31, %c0_32] : memref<72x32xf32, #tpu.memory_space<vmem>>, vector<8x32xf32>
    tpu.vector_store %arg6[%c16_31, %c0_32], %146 {strides = array<i32>} : memref<72x32xf32, #tpu.memory_space<vmem>>, vector<8x32xf32>,
    %148 = tpu.concatenate %128, %146 in 1 : vector<8x32xf32>, vector<8x32xf32> -> vector<8x64xf32>
    %cst_33 = arith.constant dense<0.000000e+00> : vector<8x256xf32>
    %149 = tpu.matmul %148, %6, %cst_33 {dimension_numbers = #tpu.dot_dimension_numbers<[1], [0], [0], [1], [0, 0, 1, 1], [], []>} : vector<8x64xf32>, vector<64x256xf32>, vector<8x256xf32> -> vector<8x256xf32>
    %c32_34 = arith.constant 32 : index
    %c0_35 = arith.constant 0 : index
    %150 = vector.load %arg5[%c32_34, %c0_35] : memref<72x128xf32, #tpu.memory_space<vmem>>, vector<8x128xf32>
    %151 = vector.extract_strided_slice %149 {offsets = [0, 0], sizes = [8, 128], strides = [1, 1]} : vector<8x256xf32> to vector<8x128xf32>
    %152 = arith.addf %150, %151 : vector<8x128xf32>
    %153 = arith.negf %152 : vector<8x128xf32>
    %154 = math.exp %153 : vector<8x128xf32>
    %cst_36 = arith.constant 1.000000e+00 : f32
    %155 = vector.broadcast %cst_36 : f32 to vector<8x128xf32>
    %156 = arith.addf %155, %154 : vector<8x128xf32>
    %157 = arith.divf %155, %156 : vector<8x128xf32>
    %158 = math.tanh %152 : vector<8x128xf32>
    %159 = vector.extract_strided_slice %157 {offsets = [0, 0], sizes = [8, 32], strides = [1, 1]} : vector<8x128xf32> to vector<8x32xf32>
    %160 = vector.extract_strided_slice %157 {offsets = [0, 32], sizes = [8, 32], strides = [1, 1]} : vector<8x128xf32> to vector<8x32xf32>
    %161 = vector.extract_strided_slice %158 {offsets = [0, 64], sizes = [8, 32], strides = [1, 1]} : vector<8x128xf32> to vector<8x32xf32>
    %162 = vector.extract_strided_slice %157 {offsets = [0, 96], sizes = [8, 32], strides = [1, 1]} : vector<8x128xf32> to vector<8x32xf32>
    %163 = arith.mulf %160, %126 : vector<8x32xf32>
    %164 = arith.mulf %159, %161 : vector<8x32xf32>
    %165 = arith.addf %163, %164 : vector<8x32xf32>
    %166 = math.tanh %165 : vector<8x32xf32>
    %167 = arith.mulf %162, %166 : vector<8x32xf32>
    %168 = vector.extract_strided_slice %149 {offsets = [0, 128], sizes = [8, 128], strides = [1, 1]} : vector<8x256xf32> to vector<8x128xf32>
    %169 = vector.broadcast %4 : vector<1x128xf32> to vector<8x128xf32>
    %170 = arith.addf %168, %169 : vector<8x128xf32>
    %171 = arith.negf %170 : vector<8x128xf32>
    %172 = math.exp %171 : vector<8x128xf32>
    %cst_37 = arith.constant 1.000000e+00 : f32
    %173 = vector.broadcast %cst_37 : f32 to vector<8x128xf32>
    %174 = arith.addf %173, %172 : vector<8x128xf32>
    %175 = arith.divf %173, %174 : vector<8x128xf32>
    %176 = math.tanh %170 : vector<8x128xf32>
    %177 = vector.extract_strided_slice %175 {offsets = [0, 0], sizes = [8, 32], strides = [1, 1]} : vector<8x128xf32> to vector<8x32xf32>
    %178 = vector.extract_strided_slice %175 {offsets = [0, 32], sizes = [8, 32], strides = [1, 1]} : vector<8x128xf32> to vector<8x32xf32>
    %179 = vector.extract_strided_slice %176 {offsets = [0, 64], sizes = [8, 32], strides = [1, 1]} : vector<8x128xf32> to vector<8x32xf32>
    %180 = vector.extract_strided_slice %175 {offsets = [0, 96], sizes = [8, 32], strides = [1, 1]} : vector<8x128xf32> to vector<8x32xf32>
    %181 = arith.mulf %178, %144 : vector<8x32xf32>
    %182 = arith.mulf %177, %179 : vector<8x32xf32>
    %183 = arith.addf %181, %182 : vector<8x32xf32>
    %184 = math.tanh %183 : vector<8x32xf32>
    %185 = arith.mulf %180, %184 : vector<8x32xf32>
    %c24_38 = arith.constant 24 : index
    %c0_39 = arith.constant 0 : index
    %186 = vector.load %arg6[%c24_38, %c0_39] : memref<72x32xf32, #tpu.memory_space<vmem>>, vector<8x32xf32>
    tpu.vector_store %arg6[%c24_38, %c0_39], %185 {strides = array<i32>} : memref<72x32xf32, #tpu.memory_space<vmem>>, vector<8x32xf32>,
    %187 = tpu.concatenate %167, %185 in 1 : vector<8x32xf32>, vector<8x32xf32> -> vector<8x64xf32>
    %cst_40 = arith.constant dense<0.000000e+00> : vector<8x256xf32>
    %188 = tpu.matmul %187, %6, %cst_40 {dimension_numbers = #tpu.dot_dimension_numbers<[1], [0], [0], [1], [0, 0, 1, 1], [], []>} : vector<8x64xf32>, vector<64x256xf32>, vector<8x256xf32> -> vector<8x256xf32>
    %c40 = arith.constant 40 : index
    %c0_41 = arith.constant 0 : index
    %189 = vector.load %arg5[%c40, %c0_41] : memref<72x128xf32, #tpu.memory_space<vmem>>, vector<8x128xf32>
    %190 = vector.extract_strided_slice %188 {offsets = [0, 0], sizes = [8, 128], strides = [1, 1]} : vector<8x256xf32> to vector<8x128xf32>
    %191 = arith.addf %189, %190 : vector<8x128xf32>
    %192 = arith.negf %191 : vector<8x128xf32>
    %193 = math.exp %192 : vector<8x128xf32>
    %cst_42 = arith.constant 1.000000e+00 : f32
    %194 = vector.broadcast %cst_42 : f32 to vector<8x128xf32>
    %195 = arith.addf %194, %193 : vector<8x128xf32>
    %196 = arith.divf %194, %195 : vector<8x128xf32>
    %197 = math.tanh %191 : vector<8x128xf32>
    %198 = vector.extract_strided_slice %196 {offsets = [0, 0], sizes = [8, 32], strides = [1, 1]} : vector<8x128xf32> to vector<8x32xf32>
    %199 = vector.extract_strided_slice %196 {offsets = [0, 32], sizes = [8, 32], strides = [1, 1]} : vector<8x128xf32> to vector<8x32xf32>
    %200 = vector.extract_strided_slice %197 {offsets = [0, 64], sizes = [8, 32], strides = [1, 1]} : vector<8x128xf32> to vector<8x32xf32>
    %201 = vector.extract_strided_slice %196 {offsets = [0, 96], sizes = [8, 32], strides = [1, 1]} : vector<8x128xf32> to vector<8x32xf32>
    %202 = arith.mulf %199, %165 : vector<8x32xf32>
    %203 = arith.mulf %198, %200 : vector<8x32xf32>
    %204 = arith.addf %202, %203 : vector<8x32xf32>
    %205 = math.tanh %204 : vector<8x32xf32>
    %206 = arith.mulf %201, %205 : vector<8x32xf32>
    %207 = vector.extract_strided_slice %188 {offsets = [0, 128], sizes = [8, 128], strides = [1, 1]} : vector<8x256xf32> to vector<8x128xf32>
    %208 = vector.broadcast %4 : vector<1x128xf32> to vector<8x128xf32>
    %209 = arith.addf %207, %208 : vector<8x128xf32>
    %210 = arith.negf %209 : vector<8x128xf32>
    %211 = math.exp %210 : vector<8x128xf32>
    %cst_43 = arith.constant 1.000000e+00 : f32
    %212 = vector.broadcast %cst_43 : f32 to vector<8x128xf32>
    %213 = arith.addf %212, %211 : vector<8x128xf32>
    %214 = arith.divf %212, %213 : vector<8x128xf32>
    %215 = math.tanh %209 : vector<8x128xf32>
    %216 = vector.extract_strided_slice %214 {offsets = [0, 0], sizes = [8, 32], strides = [1, 1]} : vector<8x128xf32> to vector<8x32xf32>
    %217 = vector.extract_strided_slice %214 {offsets = [0, 32], sizes = [8, 32], strides = [1, 1]} : vector<8x128xf32> to vector<8x32xf32>
    %218 = vector.extract_strided_slice %215 {offsets = [0, 64], sizes = [8, 32], strides = [1, 1]} : vector<8x128xf32> to vector<8x32xf32>
    %219 = vector.extract_strided_slice %214 {offsets = [0, 96], sizes = [8, 32], strides = [1, 1]} : vector<8x128xf32> to vector<8x32xf32>
    %220 = arith.mulf %217, %183 : vector<8x32xf32>
    %221 = arith.mulf %216, %218 : vector<8x32xf32>
    %222 = arith.addf %220, %221 : vector<8x32xf32>
    %223 = math.tanh %222 : vector<8x32xf32>
    %224 = arith.mulf %219, %223 : vector<8x32xf32>
    %c32_44 = arith.constant 32 : index
    %c0_45 = arith.constant 0 : index
    %225 = vector.load %arg6[%c32_44, %c0_45] : memref<72x32xf32, #tpu.memory_space<vmem>>, vector<8x32xf32>
    tpu.vector_store %arg6[%c32_44, %c0_45], %224 {strides = array<i32>} : memref<72x32xf32, #tpu.memory_space<vmem>>, vector<8x32xf32>,
    %226 = tpu.concatenate %206, %224 in 1 : vector<8x32xf32>, vector<8x32xf32> -> vector<8x64xf32>
    %cst_46 = arith.constant dense<0.000000e+00> : vector<8x256xf32>
    %227 = tpu.matmul %226, %6, %cst_46 {dimension_numbers = #tpu.dot_dimension_numbers<[1], [0], [0], [1], [0, 0, 1, 1], [], []>} : vector<8x64xf32>, vector<64x256xf32>, vector<8x256xf32> -> vector<8x256xf32>
    %c48 = arith.constant 48 : index
    %c0_47 = arith.constant 0 : index
    %228 = vector.load %arg5[%c48, %c0_47] : memref<72x128xf32, #tpu.memory_space<vmem>>, vector<8x128xf32>
    %229 = vector.extract_strided_slice %227 {offsets = [0, 0], sizes = [8, 128], strides = [1, 1]} : vector<8x256xf32> to vector<8x128xf32>
    %230 = arith.addf %228, %229 : vector<8x128xf32>
    %231 = arith.negf %230 : vector<8x128xf32>
    %232 = math.exp %231 : vector<8x128xf32>
    %cst_48 = arith.constant 1.000000e+00 : f32
    %233 = vector.broadcast %cst_48 : f32 to vector<8x128xf32>
    %234 = arith.addf %233, %232 : vector<8x128xf32>
    %235 = arith.divf %233, %234 : vector<8x128xf32>
    %236 = math.tanh %230 : vector<8x128xf32>
    %237 = vector.extract_strided_slice %235 {offsets = [0, 0], sizes = [8, 32], strides = [1, 1]} : vector<8x128xf32> to vector<8x32xf32>
    %238 = vector.extract_strided_slice %235 {offsets = [0, 32], sizes = [8, 32], strides = [1, 1]} : vector<8x128xf32> to vector<8x32xf32>
    %239 = vector.extract_strided_slice %236 {offsets = [0, 64], sizes = [8, 32], strides = [1, 1]} : vector<8x128xf32> to vector<8x32xf32>
    %240 = vector.extract_strided_slice %235 {offsets = [0, 96], sizes = [8, 32], strides = [1, 1]} : vector<8x128xf32> to vector<8x32xf32>
    %241 = arith.mulf %238, %204 : vector<8x32xf32>
    %242 = arith.mulf %237, %239 : vector<8x32xf32>
    %243 = arith.addf %241, %242 : vector<8x32xf32>
    %244 = math.tanh %243 : vector<8x32xf32>
    %245 = arith.mulf %240, %244 : vector<8x32xf32>
    %246 = vector.extract_strided_slice %227 {offsets = [0, 128], sizes = [8, 128], strides = [1, 1]} : vector<8x256xf32> to vector<8x128xf32>
    %247 = vector.broadcast %4 : vector<1x128xf32> to vector<8x128xf32>
    %248 = arith.addf %246, %247 : vector<8x128xf32>
    %249 = arith.negf %248 : vector<8x128xf32>
    %250 = math.exp %249 : vector<8x128xf32>
    %cst_49 = arith.constant 1.000000e+00 : f32
    %251 = vector.broadcast %cst_49 : f32 to vector<8x128xf32>
    %252 = arith.addf %251, %250 : vector<8x128xf32>
    %253 = arith.divf %251, %252 : vector<8x128xf32>
    %254 = math.tanh %248 : vector<8x128xf32>
    %255 = vector.extract_strided_slice %253 {offsets = [0, 0], sizes = [8, 32], strides = [1, 1]} : vector<8x128xf32> to vector<8x32xf32>
    %256 = vector.extract_strided_slice %253 {offsets = [0, 32], sizes = [8, 32], strides = [1, 1]} : vector<8x128xf32> to vector<8x32xf32>
    %257 = vector.extract_strided_slice %254 {offsets = [0, 64], sizes = [8, 32], strides = [1, 1]} : vector<8x128xf32> to vector<8x32xf32>
    %258 = vector.extract_strided_slice %253 {offsets = [0, 96], sizes = [8, 32], strides = [1, 1]} : vector<8x128xf32> to vector<8x32xf32>
    %259 = arith.mulf %256, %222 : vector<8x32xf32>
    %260 = arith.mulf %255, %257 : vector<8x32xf32>
    %261 = arith.addf %259, %260 : vector<8x32xf32>
    %262 = math.tanh %261 : vector<8x32xf32>
    %263 = arith.mulf %258, %262 : vector<8x32xf32>
    %c40_50 = arith.constant 40 : index
    %c0_51 = arith.constant 0 : index
    %264 = vector.load %arg6[%c40_50, %c0_51] : memref<72x32xf32, #tpu.memory_space<vmem>>, vector<8x32xf32>
    tpu.vector_store %arg6[%c40_50, %c0_51], %263 {strides = array<i32>} : memref<72x32xf32, #tpu.memory_space<vmem>>, vector<8x32xf32>,
    %265 = tpu.concatenate %245, %263 in 1 : vector<8x32xf32>, vector<8x32xf32> -> vector<8x64xf32>
    %cst_52 = arith.constant dense<0.000000e+00> : vector<8x256xf32>
    %266 = tpu.matmul %265, %6, %cst_52 {dimension_numbers = #tpu.dot_dimension_numbers<[1], [0], [0], [1], [0, 0, 1, 1], [], []>} : vector<8x64xf32>, vector<64x256xf32>, vector<8x256xf32> -> vector<8x256xf32>
    %c56 = arith.constant 56 : index
    %c0_53 = arith.constant 0 : index
    %267 = vector.load %arg5[%c56, %c0_53] : memref<72x128xf32, #tpu.memory_space<vmem>>, vector<8x128xf32>
    %268 = vector.extract_strided_slice %266 {offsets = [0, 0], sizes = [8, 128], strides = [1, 1]} : vector<8x256xf32> to vector<8x128xf32>
    %269 = arith.addf %267, %268 : vector<8x128xf32>
    %270 = arith.negf %269 : vector<8x128xf32>
    %271 = math.exp %270 : vector<8x128xf32>
    %cst_54 = arith.constant 1.000000e+00 : f32
    %272 = vector.broadcast %cst_54 : f32 to vector<8x128xf32>
    %273 = arith.addf %272, %271 : vector<8x128xf32>
    %274 = arith.divf %272, %273 : vector<8x128xf32>
    %275 = math.tanh %269 : vector<8x128xf32>
    %276 = vector.extract_strided_slice %274 {offsets = [0, 0], sizes = [8, 32], strides = [1, 1]} : vector<8x128xf32> to vector<8x32xf32>
    %277 = vector.extract_strided_slice %274 {offsets = [0, 32], sizes = [8, 32], strides = [1, 1]} : vector<8x128xf32> to vector<8x32xf32>
    %278 = vector.extract_strided_slice %275 {offsets = [0, 64], sizes = [8, 32], strides = [1, 1]} : vector<8x128xf32> to vector<8x32xf32>
    %279 = vector.extract_strided_slice %274 {offsets = [0, 96], sizes = [8, 32], strides = [1, 1]} : vector<8x128xf32> to vector<8x32xf32>
    %280 = arith.mulf %277, %243 : vector<8x32xf32>
    %281 = arith.mulf %276, %278 : vector<8x32xf32>
    %282 = arith.addf %280, %281 : vector<8x32xf32>
    %283 = math.tanh %282 : vector<8x32xf32>
    %284 = arith.mulf %279, %283 : vector<8x32xf32>
    %285 = vector.extract_strided_slice %266 {offsets = [0, 128], sizes = [8, 128], strides = [1, 1]} : vector<8x256xf32> to vector<8x128xf32>
    %286 = vector.broadcast %4 : vector<1x128xf32> to vector<8x128xf32>
    %287 = arith.addf %285, %286 : vector<8x128xf32>
    %288 = arith.negf %287 : vector<8x128xf32>
    %289 = math.exp %288 : vector<8x128xf32>
    %cst_55 = arith.constant 1.000000e+00 : f32
    %290 = vector.broadcast %cst_55 : f32 to vector<8x128xf32>
    %291 = arith.addf %290, %289 : vector<8x128xf32>
    %292 = arith.divf %290, %291 : vector<8x128xf32>
    %293 = math.tanh %287 : vector<8x128xf32>
    %294 = vector.extract_strided_slice %292 {offsets = [0, 0], sizes = [8, 32], strides = [1, 1]} : vector<8x128xf32> to vector<8x32xf32>
    %295 = vector.extract_strided_slice %292 {offsets = [0, 32], sizes = [8, 32], strides = [1, 1]} : vector<8x128xf32> to vector<8x32xf32>
    %296 = vector.extract_strided_slice %293 {offsets = [0, 64], sizes = [8, 32], strides = [1, 1]} : vector<8x128xf32> to vector<8x32xf32>
    %297 = vector.extract_strided_slice %292 {offsets = [0, 96], sizes = [8, 32], strides = [1, 1]} : vector<8x128xf32> to vector<8x32xf32>
    %298 = arith.mulf %295, %261 : vector<8x32xf32>
    %299 = arith.mulf %294, %296 : vector<8x32xf32>
    %300 = arith.addf %298, %299 : vector<8x32xf32>
    %301 = math.tanh %300 : vector<8x32xf32>
    %302 = arith.mulf %297, %301 : vector<8x32xf32>
    %c48_56 = arith.constant 48 : index
    %c0_57 = arith.constant 0 : index
    %303 = vector.load %arg6[%c48_56, %c0_57] : memref<72x32xf32, #tpu.memory_space<vmem>>, vector<8x32xf32>
    tpu.vector_store %arg6[%c48_56, %c0_57], %302 {strides = array<i32>} : memref<72x32xf32, #tpu.memory_space<vmem>>, vector<8x32xf32>,
    %304 = tpu.concatenate %284, %302 in 1 : vector<8x32xf32>, vector<8x32xf32> -> vector<8x64xf32>
    %cst_58 = arith.constant dense<0.000000e+00> : vector<8x256xf32>
    %305 = tpu.matmul %304, %6, %cst_58 {dimension_numbers = #tpu.dot_dimension_numbers<[1], [0], [0], [1], [0, 0, 1, 1], [], []>} : vector<8x64xf32>, vector<64x256xf32>, vector<8x256xf32> -> vector<8x256xf32>
    %c64_59 = arith.constant 64 : index
    %c0_60 = arith.constant 0 : index
    %306 = vector.load %arg5[%c64_59, %c0_60] : memref<72x128xf32, #tpu.memory_space<vmem>>, vector<8x128xf32>
    %307 = vector.extract_strided_slice %305 {offsets = [0, 0], sizes = [8, 128], strides = [1, 1]} : vector<8x256xf32> to vector<8x128xf32>
    %308 = arith.addf %306, %307 : vector<8x128xf32>
    %309 = arith.negf %308 : vector<8x128xf32>
    %310 = math.exp %309 : vector<8x128xf32>
    %cst_61 = arith.constant 1.000000e+00 : f32
    %311 = vector.broadcast %cst_61 : f32 to vector<8x128xf32>
    %312 = arith.addf %311, %310 : vector<8x128xf32>
    %313 = arith.divf %311, %312 : vector<8x128xf32>
    %314 = math.tanh %308 : vector<8x128xf32>
    %315 = vector.extract_strided_slice %313 {offsets = [0, 0], sizes = [8, 32], strides = [1, 1]} : vector<8x128xf32> to vector<8x32xf32>
    %316 = vector.extract_strided_slice %313 {offsets = [0, 32], sizes = [8, 32], strides = [1, 1]} : vector<8x128xf32> to vector<8x32xf32>
    %317 = vector.extract_strided_slice %314 {offsets = [0, 64], sizes = [8, 32], strides = [1, 1]} : vector<8x128xf32> to vector<8x32xf32>
    %318 = vector.extract_strided_slice %313 {offsets = [0, 96], sizes = [8, 32], strides = [1, 1]} : vector<8x128xf32> to vector<8x32xf32>
    %319 = arith.mulf %316, %282 : vector<8x32xf32>
    %320 = arith.mulf %315, %317 : vector<8x32xf32>
    %321 = arith.addf %319, %320 : vector<8x32xf32>
    %322 = math.tanh %321 : vector<8x32xf32>
    %323 = arith.mulf %318, %322 : vector<8x32xf32>
    %324 = vector.extract_strided_slice %305 {offsets = [0, 128], sizes = [8, 128], strides = [1, 1]} : vector<8x256xf32> to vector<8x128xf32>
    %325 = vector.broadcast %4 : vector<1x128xf32> to vector<8x128xf32>
    %326 = arith.addf %324, %325 : vector<8x128xf32>
    %327 = arith.negf %326 : vector<8x128xf32>
    %328 = math.exp %327 : vector<8x128xf32>
    %cst_62 = arith.constant 1.000000e+00 : f32
    %329 = vector.broadcast %cst_62 : f32 to vector<8x128xf32>
    %330 = arith.addf %329, %328 : vector<8x128xf32>
    %331 = arith.divf %329, %330 : vector<8x128xf32>
    %332 = math.tanh %326 : vector<8x128xf32>
    %333 = vector.extract_strided_slice %331 {offsets = [0, 0], sizes = [8, 32], strides = [1, 1]} : vector<8x128xf32> to vector<8x32xf32>
    %334 = vector.extract_strided_slice %331 {offsets = [0, 32], sizes = [8, 32], strides = [1, 1]} : vector<8x128xf32> to vector<8x32xf32>
    %335 = vector.extract_strided_slice %332 {offsets = [0, 64], sizes = [8, 32], strides = [1, 1]} : vector<8x128xf32> to vector<8x32xf32>
    %336 = vector.extract_strided_slice %331 {offsets = [0, 96], sizes = [8, 32], strides = [1, 1]} : vector<8x128xf32> to vector<8x32xf32>
    %337 = arith.mulf %334, %300 : vector<8x32xf32>
    %338 = arith.mulf %333, %335 : vector<8x32xf32>
    %339 = arith.addf %337, %338 : vector<8x32xf32>
    %340 = math.tanh %339 : vector<8x32xf32>
    %341 = arith.mulf %336, %340 : vector<8x32xf32>
    %c56_63 = arith.constant 56 : index
    %c0_64 = arith.constant 0 : index
    %342 = vector.load %arg6[%c56_63, %c0_64] : memref<72x32xf32, #tpu.memory_space<vmem>>, vector<8x32xf32>
    tpu.vector_store %arg6[%c56_63, %c0_64], %341 {strides = array<i32>} : memref<72x32xf32, #tpu.memory_space<vmem>>, vector<8x32xf32>,
    %343 = tpu.concatenate %323, %341 in 1 : vector<8x32xf32>, vector<8x32xf32> -> vector<8x64xf32>
    %cst_65 = arith.constant dense<0.000000e+00> : vector<8x256xf32>
    %344 = tpu.matmul %343, %6, %cst_65 {dimension_numbers = #tpu.dot_dimension_numbers<[1], [0], [0], [1], [0, 0, 1, 1], [], []>} : vector<8x64xf32>, vector<64x256xf32>, vector<8x256xf32> -> vector<8x256xf32>
    %345 = vector.extract_strided_slice %344 {offsets = [0, 128], sizes = [8, 128], strides = [1, 1]} : vector<8x256xf32> to vector<8x128xf32>
    %346 = vector.broadcast %4 : vector<1x128xf32> to vector<8x128xf32>
    %347 = arith.addf %345, %346 : vector<8x128xf32>
    %348 = arith.negf %347 : vector<8x128xf32>
    %349 = math.exp %348 : vector<8x128xf32>
    %cst_66 = arith.constant 1.000000e+00 : f32
    %350 = vector.broadcast %cst_66 : f32 to vector<8x128xf32>
    %351 = arith.addf %350, %349 : vector<8x128xf32>
    %352 = arith.divf %350, %351 : vector<8x128xf32>
    %353 = math.tanh %347 : vector<8x128xf32>
    %354 = vector.extract_strided_slice %352 {offsets = [0, 0], sizes = [8, 32], strides = [1, 1]} : vector<8x128xf32> to vector<8x32xf32>
    %355 = vector.extract_strided_slice %352 {offsets = [0, 32], sizes = [8, 32], strides = [1, 1]} : vector<8x128xf32> to vector<8x32xf32>
    %356 = vector.extract_strided_slice %353 {offsets = [0, 64], sizes = [8, 32], strides = [1, 1]} : vector<8x128xf32> to vector<8x32xf32>
    %357 = vector.extract_strided_slice %352 {offsets = [0, 96], sizes = [8, 32], strides = [1, 1]} : vector<8x128xf32> to vector<8x32xf32>
    %358 = arith.mulf %355, %339 : vector<8x32xf32>
    %359 = arith.mulf %354, %356 : vector<8x32xf32>
    %360 = arith.addf %358, %359 : vector<8x32xf32>
    %361 = math.tanh %360 : vector<8x32xf32>
    %362 = arith.mulf %357, %361 : vector<8x32xf32>
    %c64_67 = arith.constant 64 : index
    %c0_68 = arith.constant 0 : index
    %363 = vector.load %arg6[%c64_67, %c0_68] : memref<72x32xf32, #tpu.memory_space<vmem>>, vector<8x32xf32>
    tpu.vector_store %arg6[%c64_67, %c0_68], %362 {strides = array<i32>} : memref<72x32xf32, #tpu.memory_space<vmem>>, vector<8x32xf32>,
    %c0_69 = arith.constant 0 : index
    %c0_70 = arith.constant 0 : index
    %364 = vector.load %arg6[%c0_69, %c0_70] : memref<72x32xf32, #tpu.memory_space<vmem>>, vector<72x32xf32>
    %cst_71 = arith.constant dense<0.000000e+00> : vector<72x128xf32>
    %365 = tpu.matmul %364, %1, %cst_71 {dimension_numbers = #tpu.dot_dimension_numbers<[1], [0], [0], [1], [0, 0, 1, 1], [], []>} : vector<72x32xf32>, vector<32x128xf32>, vector<72x128xf32> -> vector<72x128xf32>
    %366 = vector.broadcast %5 : vector<1x128xf32> to vector<72x128xf32>
    %367 = arith.addf %365, %366 : vector<72x128xf32>
    %c0_72 = arith.constant 0 : index
    %c0_73 = arith.constant 0 : index
    %368 = vector.load %arg4[%c0_72, %c0_73] : memref<72x128xf32, #tpu.memory_space<vmem>>, vector<72x128xf32>
    tpu.vector_store %arg4[%c0_72, %c0_73], %367 {strides = array<i32>} : memref<72x128xf32, #tpu.memory_space<vmem>>, vector<72x128xf32>,
    return
  }
  func.func @transform_0(%arg0: i32) -> (i32, i32) {
    %c0_i32 = arith.constant 0 : i32
    %c0_i32_0 = arith.constant 0 : i32
    %c0_i32_1 = arith.constant 0 : i32
    return %c0_i32, %c0_i32_0 : i32, i32
  }
  func.func @transform_1(%arg0: i32) -> (i32, i32) {
    %c0_i32 = arith.constant 0 : i32
    %c0_i32_0 = arith.constant 0 : i32
    %c0_i32_1 = arith.constant 0 : i32
    return %c0_i32, %c0_i32_0 : i32, i32
  }
  func.func @transform_2(%arg0: i32) -> (i32, i32) {
    %c0_i32 = arith.constant 0 : i32
    %c0_i32_0 = arith.constant 0 : i32
    %c0_i32_1 = arith.constant 0 : i32
    return %c0_i32, %c0_i32_0 : i32, i32
  }
  func.func @transform_3(%arg0: i32) -> (i32, i32) {
    %c0_i32 = arith.constant 0 : i32
    %c0_i32_0 = arith.constant 0 : i32
    %c0_i32_1 = arith.constant 0 : i32
    return %c0_i32, %c0_i32_0 : i32, i32
  }
}

</mosaic_0001>

<llo_original>
// kernel: tpu_custom_call.1
$region0: #{tpu_custom_call.1}
  #allocation0 [shape = 'u32[]', space=smem, size = 0x4, offset = 0x4, fixed_abs, tag = 'smem constant byte address 0x4 - core index']
  #allocation1 [shape = 'u32[144,128]{1,0:T(1,128)}', space=vmem, size = 0x12000, scoped, tag = 'internal scratch']
  #allocation2 [shape = 'f32[72,128]{1,0:T(8,128)}', space=vmem, size = 0x9000, scoped, tag = 'scratch operand']
  #allocation3 [shape = 'f32[72,32]{1,0:T(8,128)}', space=vmem, size = 0x9000, scoped, tag = 'scratch operand']
  %s0 = inlined_call_operand.vmem [shape: f32[72,32], index: 0, kind: input, shape index: {}]
  %s1 = inlined_call_operand.vmem [shape: f32[72,128], index: 1, kind: input, shape index: {}]
  %s2 = inlined_call_operand.hbm [shape: f32[64,256], index: 2, kind: input, shape index: {}]
  %s3 = inlined_call_operand.hbm [shape: f32[72,128], index: 3, kind: output, shape index: {}]
  %s4 = sld [smem:[#allocation0]]
  $region26: #{tpu_custom_call.1} parent=0
    _
  %s6 = ssub.s32 1, %s4
  %s7 = scalar_select 0, %s6, %s4
  $region1: #{tpu_custom_call.1} parent=0
    #allocation4 [shape = 'u8[65536]{0}', space=vmem, size = 0x10000, scoped, tag = 'input window, operand 2, single buffered']
    #allocation5 [shape = 's32[1]{0}', space=sflag, size = 0x4, scoped, tag = 'scoped memory for tpu_custom_call.1']
    #allocation6 [shape = 's32[1]{0}', space=sflag, size = 0x4, scoped, tag = 'scoped memory for tpu_custom_call.1']
    #allocation7 [shape = 'u8[36864]{0}', space=vmem, size = 0x9000, scoped, tag = 'output window, operand 0, single buffered']
    %8 = vsyncpa [#allocation5], 0
    %9 = vsyncpa [#allocation6], 0
    // Predicated region
    $region2: #{tpu_custom_call.1} parent=1 // pred_check
      _
    $region3: #{tpu_custom_call.1} parent=1 // pred_check_branch
      %11 = sbr.rel (0) target = $region5
    $region4: #{tpu_custom_call.1} parent=1 // pred_region
      _
    $region5: #{tpu_custom_call.1} parent=1 // pred_fallthru
      _
    // Predicated region
    $region6: #{tpu_custom_call.1} parent=1 // pred_check
      _
    $region7: #{tpu_custom_call.1} parent=1 // pred_check_branch
      %13 = sbr.rel (0) target = $region9
    $region8: #{tpu_custom_call.1} parent=1 // pred_region
      _
    $region9: #{tpu_custom_call.1} parent=1 // pred_fallthru
      _
    // Predicated region
    $region10: #{tpu_custom_call.1} parent=1 // pred_check
      _
    $region11: #{tpu_custom_call.1} parent=1 // pred_check_branch
      %15 = sbr.rel (0) target = $region13
    $region12: #{tpu_custom_call.1} parent=1 // pred_region
      %s17 = ssub.s32 2048, 2048
      %18 = vsyncadd [#allocation5], %s17
      %s19 = sshll.u32 [#allocation4], 4
      %s20 = int_to_ptr.vmem [resolvable:$true] %s19
      %25 = dma.hbm_to_vmem [thread:$0]  %s2, 2048, %s20, [#allocation5], 256, 256, 16
    $region13: #{tpu_custom_call.1} parent=1 // pred_fallthru
      _
    // Predicated region
    $region14: #{tpu_custom_call.1} parent=1 // pred_check
      _
    $region15: #{tpu_custom_call.1} parent=1 // pred_check_branch
      %27 = sbr.rel (0) target = $region17
    $region16: #{tpu_custom_call.1} parent=1 // pred_region
      %28 = dma.done [#allocation5], 2048
    $region17: #{tpu_custom_call.1} parent=1 // pred_fallthru
      _
    %v29 = vld [vmem:[%s1] sm:$0xff]
    %v30 = vld [vmem:[%s1 + $0x8] sm:$0xff]
    %v31 = vld [vmem:[%s1 + $0x10] sm:$0xff]
    %v32 = vld [vmem:[%s1 + $0x18] sm:$0xff]
    %v33 = vld [vmem:[%s1 + $0x20] sm:$0xff]
    %v34 = vld [vmem:[%s1 + $0x28] sm:$0xff]
    %v35 = vld [vmem:[%s1 + $0x30] sm:$0xff]
    %v36 = vld [vmem:[%s1 + $0x38] sm:$0xff]
    %v37 = vld [vmem:[%s1 + $0x40] sm:$0xff]
    %v38 = vld [vmem:[#allocation4] sm:$0xff]
    %v39 = vld [vmem:[#allocation4 + $0x8] sm:$0xff]
    %v40 = vld [vmem:[#allocation4 + $0x10] sm:$0xff]
    %v41 = vld [vmem:[#allocation4 + $0x18] sm:$0xff]
    %v42 = vld [vmem:[#allocation4 + $0x20] sm:$0xff]
    %v43 = vld [vmem:[#allocation4 + $0x28] sm:$0xff]
    %v44 = vld [vmem:[#allocation4 + $0x30] sm:$0xff]
    %v45 = vld [vmem:[#allocation4 + $0x38] sm:$0xff]
    %v46 = vld [vmem:[#allocation4 + $0x40] sm:$0xff]
    %v47 = vld [vmem:[#allocation4 + $0x48] sm:$0xff]
    %v48 = vld [vmem:[#allocation4 + $0x50] sm:$0xff]
    %v49 = vld [vmem:[#allocation4 + $0x58] sm:$0xff]
    %v50 = vld [vmem:[#allocation4 + $0x60] sm:$0xff]
    %v51 = vld [vmem:[#allocation4 + $0x68] sm:$0xff]
    %v52 = vld [vmem:[#allocation4 + $0x70] sm:$0xff]
    %v53 = vld [vmem:[#allocation4 + $0x78] sm:$0xff]
    %v54 = vld [vmem:[%s0] sm:$0xff]
    %v55 = vld [vmem:[%s0 + $0x8] sm:$0xff]
    %v56 = vld [vmem:[%s0 + $0x10] sm:$0xff]
    %v57 = vld [vmem:[%s0 + $0x18] sm:$0xff]
    %v58 = vld [vmem:[%s0 + $0x20] sm:$0xff]
    %v59 = vld [vmem:[%s0 + $0x28] sm:$0xff]
    %v60 = vld [vmem:[%s0 + $0x30] sm:$0xff]
    %v61 = vld [vmem:[%s0 + $0x38] sm:$0xff]
    %v62 = vld [vmem:[%s0 + $0x40] sm:$0xff]
    %v63 = vlaneseq
    %v64 = vshrl.u32 %v63, 7
    %v65 = vsub.s32 0, %v64
    %v66 = vrot.slane %v37, %v65
    %vm67 = vcmask 261120
    %v69 = vsel %vm67, %v54, 0
    %v72 = vsel %vm67, %v55, 0
    %v75 = vsel %vm67, %v56, 0
    %v78 = vsel %vm67, %v57, 0
    %v81 = vsel %vm67, %v58, 0
    %v84 = vsel %vm67, %v59, 0
    %v87 = vsel %vm67, %v60, 0
    %v90 = vsel %vm67, %v61, 0
    %v93 = vsel %vm67, %v62, 0
    %95 = vmatprep.subr.mxu0 0.0
    %96 = vmatpush1.msra.mxu0 0.0
    %97 = vmatprep.subr.mxu0 0.0
    %98 = vmatpush1.msra.mxu0 0.0
    %99 = vmatprep.subr.mxu0 0.0
    %100 = vmatpush1.msra.mxu0 0.0
    %101 = vmatprep.subr.mxu0 0.0
    %102 = vmatpush1.msra.mxu0 0.0
    %103 = vmatprep.subr.mxu0 0.0
    %104 = vmatpush1.msra.mxu0 0.0
    %105 = vmatprep.subr.mxu0 0.0
    %106 = vmatpush1.msra.mxu0 0.0
    %107 = vmatprep.subr.mxu0 0.0
    %108 = vmatpush1.msra.mxu0 0.0
    %109 = vmatprep.subr.mxu0 0.0
    %110 = vmatpush1.msra.mxu0 0.0
    %111 = vmatprep.subr.mxu0 0.0
    %112 = vmatpush1.msra.mxu0 0.0
    %113 = vmatprep.subr.mxu0 0.0
    %114 = vmatpush1.msra.mxu0 0.0
    %115 = vmatprep.subr.mxu0 0.0
    %116 = vmatpush1.msra.mxu0 0.0
    %117 = vmatprep.subr.mxu0 0.0
    %118 = vmatpush1.msra.mxu0 0.0
    %119 = vmatprep.subr.mxu0 0.0
    %120 = vmatpush1.msra.mxu0 %v32
    %121 = vmatprep.subr.mxu0 0.0
    %122 = vmatpush1.msra.mxu0 %v31
    %123 = vmatprep.subr.mxu0 0.0
    %124 = vmatpush1.msra.mxu0 %v30
    %125 = vmatprep.subr.mxu0 0.0
    %126 = vmatpush1.msra.mxu0 %v29
    %127 = vmatprep.subr.mxu0 0.0
    %128 = vmatpush2.msra.mxu0 0.0
    %129 = vmatprep.subr.mxu0 0.0
    %130 = vmatpush2.msra.mxu0 0.0
    %131 = vmatprep.subr.mxu0 0.0
    %132 = vmatpush2.msra.mxu0 0.0
    %133 = vmatprep.subr.mxu0 0.0
    %134 = vmatpush2.msra.mxu0 0.0
    %135 = vmatprep.subr.mxu0 0.0
    %136 = vmatpush2.msra.mxu0 0.0
    %137 = vmatprep.subr.mxu0 0.0
    %138 = vmatpush2.msra.mxu0 0.0
    %139 = vmatprep.subr.mxu0 0.0
    %140 = vmatpush2.msra.mxu0 0.0
    %141 = vmatprep.subr.mxu0 0.0
    %142 = vmatpush2.msra.mxu0 0.0
    %143 = vmatprep.subr.mxu0 0.0
    %144 = vmatpush2.msra.mxu0 0.0
    %145 = vmatprep.subr.mxu0 0.0
    %146 = vmatpush2.msra.mxu0 0.0
    %147 = vmatprep.subr.mxu0 0.0
    %148 = vmatpush2.msra.mxu0 0.0
    %149 = vmatprep.subr.mxu0 0.0
    %150 = vmatpush2.msra.mxu0 0.0
    %151 = vmatprep.subr.mxu0 0.0
    %152 = vmatpush2.msra.mxu0 0.0
    %153 = vmatprep.subr.mxu0 0.0
    %154 = vmatpush2.msra.mxu0 0.0
    %155 = vmatprep.subr.mxu0 0.0
    %156 = vmatpush2.msra.mxu0 0.0
    %157 = vmatprep.subr.mxu0 0.0
    %158 = vmatpush2.msra.mxu0 0.0
    %159 = vmatprep.mubr.f32.mxu0 0.0
    %160 = vmatmul.mubr.f32.gmra.mxu0 %v69
    %v161 = vpop.f32.mrf.mxu0
    %v162 = vadd.f32 %v66, %v161
    %v163 = vpop.f32.mrf.mxu0
    %164 = vmatprep.mubr.f32.mxu0 0.0
    %165 = vmatmul.mubr.f32.gmra.mxu0 %v72
    %v166 = vpop.f32.mrf.mxu0
    %v167 = vadd.f32 %v66, %v166
    %v168 = vpop.f32.mrf.mxu0
    %169 = vmatprep.mubr.f32.mxu0 0.0
    %170 = vmatmul.mubr.f32.gmra.mxu0 %v75
    %v171 = vpop.f32.mrf.mxu0
    %v172 = vadd.f32 %v66, %v171
    %v173 = vpop.f32.mrf.mxu0
    %174 = vmatprep.mubr.f32.mxu0 0.0
    %175 = vmatmul.mubr.f32.gmra.mxu0 %v78
    %v176 = vpop.f32.mrf.mxu0
    %v177 = vadd.f32 %v66, %v176
    %v178 = vpop.f32.mrf.mxu0
    %179 = vmatprep.mubr.f32.mxu0 0.0
    %180 = vmatmul.mubr.f32.gmra.mxu0 %v81
    %v181 = vpop.f32.mrf.mxu0
    %v182 = vadd.f32 %v66, %v181
    %v183 = vpop.f32.mrf.mxu0
    %184 = vmatprep.mubr.f32.mxu0 0.0
    %185 = vmatmul.mubr.f32.gmra.mxu0 %v84
    %v186 = vpop.f32.mrf.mxu0
    %v187 = vadd.f32 %v66, %v186
    %v188 = vpop.f32.mrf.mxu0
    %189 = vmatprep.mubr.f32.mxu0 0.0
    %190 = vmatmul.mubr.f32.gmra.mxu0 %v87
    %v191 = vpop.f32.mrf.mxu0
    %v192 = vadd.f32 %v66, %v191
    %v193 = vpop.f32.mrf.mxu0
    %194 = vmatprep.mubr.f32.mxu0 0.0
    %195 = vmatmul.mubr.f32.gmra.mxu0 %v90
    %v196 = vpop.f32.mrf.mxu0
    %v197 = vadd.f32 %v66, %v196
    %v198 = vpop.f32.mrf.mxu0
    %199 = vmatprep.mubr.f32.mxu0 0.0
    %200 = vmatmul.mubr.f32.gmra.mxu0 %v93
    %v201 = vpop.f32.mrf.mxu0
    %v202 = vadd.f32 %v66, %v201
    %v203 = vpop.f32.mrf.mxu0
    %204 = vdwg.mxu0
    %205 = vst [vmem:[#allocation2] sm:$0xff] %v162
    %206 = vst [vmem:[#allocation2 + $0x8] sm:$0xff] %v167
    %207 = vst [vmem:[#allocation2 + $0x10] sm:$0xff] %v172
    %208 = vst [vmem:[#allocation2 + $0x18] sm:$0xff] %v177
    %209 = vst [vmem:[#allocation2 + $0x20] sm:$0xff] %v182
    %210 = vst [vmem:[#allocation2 + $0x28] sm:$0xff] %v187
    %211 = vst [vmem:[#allocation2 + $0x30] sm:$0xff] %v192
    %212 = vst [vmem:[#allocation2 + $0x38] sm:$0xff] %v197
    %213 = vst [vmem:[#allocation2 + $0x40] sm:$0xff] %v202
    %v214 = vld [vmem:[#allocation2] sm:$0xff]
    %v215 = vxor.u32 %v214, 2147483648
    %v216 = vmul.f32 %v215, 1.442695
    %v217 = vpow.pop %v216
    %v218 = vadd.f32 %v217, 1.0
    %v219 = vrcp.pop %v218
    %v220 = vmul.f32 1.0, %v219
    %v221 = vtanh.pop %v214
    %v222 = vmul.f32 %v220, 0.0
    %224 = vrot.lane.b32.xlu0 %v221, 64
    %v225 = vpop.permute.xlu0 %224
    %v227 = vmul.f32 %v220, %v225
    %229 = vrot.lane.b32.xlu0 %v227, 32
    %v230 = vpop.permute.xlu0 %229
    %v232 = vadd.f32 %v222, %v230
    %v233 = vtanh.pop %v232
    %235 = vrot.lane.b32.xlu0 %v233, 64
    %v236 = vpop.permute.xlu0 %235
    %v238 = vmul.f32 %v220, %v236
    %240 = vrot.lane.b32.xlu0 %v238, 32
    %v241 = vpop.permute.xlu0 %240
    %v243 = vsel %vm67, %v241, 0.0
    %vm244 = vcmask 523264
    %v246 = vsel %vm244, %v243, 0
    %248 = vmatprep.subr.mxu0 0.0
    %249 = vmatpush1.msra.mxu0 0.0
    %250 = vmatprep.subr.mxu0 0.0
    %251 = vmatpush1.msra.mxu0 0.0
    %252 = vmatprep.subr.mxu0 0.0
    %253 = vmatpush1.msra.mxu0 0.0
    %254 = vmatprep.subr.mxu0 0.0
    %255 = vmatpush1.msra.mxu0 0.0
    %256 = vmatprep.subr.mxu0 0.0
    %257 = vmatpush1.msra.mxu0 0.0
    %258 = vmatprep.subr.mxu0 0.0
    %259 = vmatpush1.msra.mxu0 0.0
    %260 = vmatprep.subr.mxu0 0.0
    %261 = vmatpush1.msra.mxu0 0.0
    %262 = vmatprep.subr.mxu0 0.0
    %263 = vmatpush1.msra.mxu0 0.0
    %264 = vmatprep.subr.mxu0 %v53
    %265 = vmatpush1.msra.mxu0 %v52
    %266 = vmatprep.subr.mxu0 %v51
    %267 = vmatpush1.msra.mxu0 %v50
    %268 = vmatprep.subr.mxu0 %v49
    %269 = vmatpush1.msra.mxu0 %v48
    %270 = vmatprep.subr.mxu0 %v47
    %271 = vmatpush1.msra.mxu0 %v46
    %272 = vmatprep.subr.mxu0 %v45
    %273 = vmatpush1.msra.mxu0 %v44
    %274 = vmatprep.subr.mxu0 %v43
    %275 = vmatpush1.msra.mxu0 %v42
    %276 = vmatprep.subr.mxu0 %v41
    %277 = vmatpush1.msra.mxu0 %v40
    %278 = vmatprep.subr.mxu0 %v39
    %279 = vmatpush1.msra.mxu0 %v38
    %280 = vmatprep.subr.mxu0 0.0
    %281 = vmatpush2.msra.mxu0 0.0
    %282 = vmatprep.subr.mxu0 0.0
    %283 = vmatpush2.msra.mxu0 0.0
    %284 = vmatprep.subr.mxu0 0.0
    %285 = vmatpush2.msra.mxu0 0.0
    %286 = vmatprep.subr.mxu0 0.0
    %287 = vmatpush2.msra.mxu0 0.0
    %288 = vmatprep.subr.mxu0 0.0
    %289 = vmatpush2.msra.mxu0 0.0
    %290 = vmatprep.subr.mxu0 0.0
    %291 = vmatpush2.msra.mxu0 0.0
    %292 = vmatprep.subr.mxu0 0.0
    %293 = vmatpush2.msra.mxu0 0.0
    %294 = vmatprep.subr.mxu0 0.0
    %295 = vmatpush2.msra.mxu0 0.0
    %296 = vmatprep.subr.mxu0 0.0
    %297 = vmatpush2.msra.mxu0 0.0
    %298 = vmatprep.subr.mxu0 0.0
    %299 = vmatpush2.msra.mxu0 0.0
    %300 = vmatprep.subr.mxu0 0.0
    %301 = vmatpush2.msra.mxu0 0.0
    %302 = vmatprep.subr.mxu0 0.0
    %303 = vmatpush2.msra.mxu0 0.0
    %304 = vmatprep.subr.mxu0 0.0
    %305 = vmatpush2.msra.mxu0 0.0
    %306 = vmatprep.subr.mxu0 0.0
    %307 = vmatpush2.msra.mxu0 0.0
    %308 = vmatprep.subr.mxu0 0.0
    %309 = vmatpush2.msra.mxu0 0.0
    %310 = vmatprep.subr.mxu0 0.0
    %311 = vmatpush2.msra.mxu0 0.0
    %312 = vmatprep.mubr.f32.mxu0 0.0
    %313 = vmatmul.mubr.f32.gmra.mxu0 %v246
    %v314 = vpop.f32.mrf.mxu0
    %v315 = vadd.f32 0.0, %v314
    %v316 = vpop.f32.mrf.mxu0
    %v317 = vadd.f32 0.0, %v316
    %318 = vdwg.mxu0
    %v319 = vld [vmem:[#allocation2 + $0x8] sm:$0xff]
    %v320 = vadd.f32 %v319, %v315
    %v321 = vxor.u32 %v320, 2147483648
    %v322 = vmul.f32 %v321, 1.442695
    %v323 = vpow.pop %v322
    %v324 = vadd.f32 %v323, 1.0
    %v325 = vrcp.pop %v324
    %v326 = vmul.f32 1.0, %v325
    %v327 = vtanh.pop %v320
    %v328 = vmul.f32 %v326, %v232
    %330 = vrot.lane.b32.xlu0 %v327, 64
    %v331 = vpop.permute.xlu0 %330
    %v333 = vmul.f32 %v326, %v331
    %335 = vrot.lane.b32.xlu0 %v333, 32
    %v336 = vpop.permute.xlu0 %335
    %v338 = vadd.f32 %v328, %v336
    %v339 = vtanh.pop %v338
    %341 = vrot.lane.b32.xlu0 %v339, 64
    %v342 = vpop.permute.xlu0 %341
    %v344 = vmul.f32 %v326, %v342
    %v345 = vlaneseq
    %v346 = vshrl.u32 %v345, 7
    %v347 = vsub.s32 1, %v346
    %v348 = vrot.slane %v37, %v347
    %v349 = vadd.f32 %v317, %v348
    %v350 = vxor.u32 %v349, 2147483648
    %v351 = vmul.f32 %v350, 1.442695
    %v352 = vpow.pop %v351
    %v353 = vadd.f32 %v352, 1.0
    %v354 = vrcp.pop %v353
    %v355 = vmul.f32 1.0, %v354
    %v356 = vtanh.pop %v349
    %v357 = vmul.f32 %v355, 0.0
    %359 = vrot.lane.b32.xlu0 %v356, 64
    %v360 = vpop.permute.xlu0 %359
    %v362 = vmul.f32 %v355, %v360
    %364 = vrot.lane.b32.xlu0 %v362, 32
    %v365 = vpop.permute.xlu0 %364
    %v367 = vadd.f32 %v357, %v365
    %v368 = vtanh.pop %v367
    %370 = vrot.lane.b32.xlu0 %v368, 64
    %v371 = vpop.permute.xlu0 %370
    %v373 = vmul.f32 %v355, %v371
    %375 = vrot.lane.b32.xlu0 %v373, 32
    %v376 = vpop.permute.xlu0 %375
    %378 = vst.msk [vmem:[#allocation3] sm:$0xff] %vm67, %v376
    %380 = vrot.lane.b32.xlu0 %v344, 32
    %v381 = vpop.permute.xlu0 %380
    %383 = vrot.lane.b32.xlu0 %v373, 64
    %v384 = vpop.permute.xlu0 %383
    %v386 = vsel %vm67, %v381, %v384
    %v388 = vsel %vm244, %v386, 0
    %390 = vmatprep.subr.mxu0 0.0
    %391 = vmatpush1.msra.mxu0 0.0
    %392 = vmatprep.subr.mxu0 0.0
    %393 = vmatpush1.msra.mxu0 0.0
    %394 = vmatprep.subr.mxu0 0.0
    %395 = vmatpush1.msra.mxu0 0.0
    %396 = vmatprep.subr.mxu0 0.0
    %397 = vmatpush1.msra.mxu0 0.0
    %398 = vmatprep.subr.mxu0 0.0
    %399 = vmatpush1.msra.mxu0 0.0
    %400 = vmatprep.subr.mxu0 0.0
    %401 = vmatpush1.msra.mxu0 0.0
    %402 = vmatprep.subr.mxu0 0.0
    %403 = vmatpush1.msra.mxu0 0.0
    %404 = vmatprep.subr.mxu0 0.0
    %405 = vmatpush1.msra.mxu0 0.0
    %406 = vmatprep.subr.mxu0 %v53
    %407 = vmatpush1.msra.mxu0 %v52
    %408 = vmatprep.subr.mxu0 %v51
    %409 = vmatpush1.msra.mxu0 %v50
    %410 = vmatprep.subr.mxu0 %v49
    %411 = vmatpush1.msra.mxu0 %v48
    %412 = vmatprep.subr.mxu0 %v47
    %413 = vmatpush1.msra.mxu0 %v46
    %414 = vmatprep.subr.mxu0 %v45
    %415 = vmatpush1.msra.mxu0 %v44
    %416 = vmatprep.subr.mxu0 %v43
    %417 = vmatpush1.msra.mxu0 %v42
    %418 = vmatprep.subr.mxu0 %v41
    %419 = vmatpush1.msra.mxu0 %v40
    %420 = vmatprep.subr.mxu0 %v39
    %421 = vmatpush1.msra.mxu0 %v38
    %422 = vmatprep.subr.mxu0 0.0
    %423 = vmatpush2.msra.mxu0 0.0
    %424 = vmatprep.subr.mxu0 0.0
    %425 = vmatpush2.msra.mxu0 0.0
    %426 = vmatprep.subr.mxu0 0.0
    %427 = vmatpush2.msra.mxu0 0.0
    %428 = vmatprep.subr.mxu0 0.0
    %429 = vmatpush2.msra.mxu0 0.0
    %430 = vmatprep.subr.mxu0 0.0
    %431 = vmatpush2.msra.mxu0 0.0
    %432 = vmatprep.subr.mxu0 0.0
    %433 = vmatpush2.msra.mxu0 0.0
    %434 = vmatprep.subr.mxu0 0.0
    %435 = vmatpush2.msra.mxu0 0.0
    %436 = vmatprep.subr.mxu0 0.0
    %437 = vmatpush2.msra.mxu0 0.0
    %438 = vmatprep.subr.mxu0 0.0
    %439 = vmatpush2.msra.mxu0 0.0
    %440 = vmatprep.subr.mxu0 0.0
    %441 = vmatpush2.msra.mxu0 0.0
    %442 = vmatprep.subr.mxu0 0.0
    %443 = vmatpush2.msra.mxu0 0.0
    %444 = vmatprep.subr.mxu0 0.0
    %445 = vmatpush2.msra.mxu0 0.0
    %446 = vmatprep.subr.mxu0 0.0
    %447 = vmatpush2.msra.mxu0 0.0
    %448 = vmatprep.subr.mxu0 0.0
    %449 = vmatpush2.msra.mxu0 0.0
    %450 = vmatprep.subr.mxu0 0.0
    %451 = vmatpush2.msra.mxu0 0.0
    %452 = vmatprep.subr.mxu0 0.0
    %453 = vmatpush2.msra.mxu0 0.0
    %454 = vmatprep.mubr.f32.mxu0 0.0
    %455 = vmatmul.mubr.f32.gmra.mxu0 %v388
    %v456 = vpop.f32.mrf.mxu0
    %v457 = vadd.f32 0.0, %v456
    %v458 = vpop.f32.mrf.mxu0
    %v459 = vadd.f32 0.0, %v458
    %460 = vdwg.mxu0
    %v461 = vld [vmem:[#allocation2 + $0x10] sm:$0xff]
    %v462 = vadd.f32 %v461, %v457
    %v463 = vxor.u32 %v462, 2147483648
    %v464 = vmul.f32 %v463, 1.442695
    %v465 = vpow.pop %v464
    %v466 = vadd.f32 %v465, 1.0
    %v467 = vrcp.pop %v466
    %v468 = vmul.f32 1.0, %v467
    %v469 = vtanh.pop %v462
    %v470 = vmul.f32 %v468, %v338
    %472 = vrot.lane.b32.xlu0 %v469, 64
    %v473 = vpop.permute.xlu0 %472
    %v475 = vmul.f32 %v468, %v473
    %477 = vrot.lane.b32.xlu0 %v475, 32
    %v478 = vpop.permute.xlu0 %477
    %v480 = vadd.f32 %v470, %v478
    %v481 = vtanh.pop %v480
    %483 = vrot.lane.b32.xlu0 %v481, 64
    %v484 = vpop.permute.xlu0 %483
    %v486 = vmul.f32 %v468, %v484
    %v487 = vadd.f32 %v459, %v348
    %v488 = vxor.u32 %v487, 2147483648
    %v489 = vmul.f32 %v488, 1.442695
    %v490 = vpow.pop %v489
    %v491 = vadd.f32 %v490, 1.0
    %v492 = vrcp.pop %v491
    %v493 = vmul.f32 1.0, %v492
    %v494 = vtanh.pop %v487
    %v495 = vmul.f32 %v493, %v367
    %497 = vrot.lane.b32.xlu0 %v494, 64
    %v498 = vpop.permute.xlu0 %497
    %v500 = vmul.f32 %v493, %v498
    %502 = vrot.lane.b32.xlu0 %v500, 32
    %v503 = vpop.permute.xlu0 %502
    %v505 = vadd.f32 %v495, %v503
    %v506 = vtanh.pop %v505
    %508 = vrot.lane.b32.xlu0 %v506, 64
    %v509 = vpop.permute.xlu0 %508
    %v511 = vmul.f32 %v493, %v509
    %513 = vrot.lane.b32.xlu0 %v511, 32
    %v514 = vpop.permute.xlu0 %513
    %516 = vst.msk [vmem:[#allocation3 + $0x8] sm:$0xff] %vm67, %v514
    %518 = vrot.lane.b32.xlu0 %v486, 32
    %v519 = vpop.permute.xlu0 %518
    %521 = vrot.lane.b32.xlu0 %v511, 64
    %v522 = vpop.permute.xlu0 %521
    %v524 = vsel %vm67, %v519, %v522
    %v526 = vsel %vm244, %v524, 0
    %528 = vmatprep.subr.mxu0 0.0
    %529 = vmatpush1.msra.mxu0 0.0
    %530 = vmatprep.subr.mxu0 0.0
    %531 = vmatpush1.msra.mxu0 0.0
    %532 = vmatprep.subr.mxu0 0.0
    %533 = vmatpush1.msra.mxu0 0.0
    %534 = vmatprep.subr.mxu0 0.0
    %535 = vmatpush1.msra.mxu0 0.0
    %536 = vmatprep.subr.mxu0 0.0
    %537 = vmatpush1.msra.mxu0 0.0
    %538 = vmatprep.subr.mxu0 0.0
    %539 = vmatpush1.msra.mxu0 0.0
    %540 = vmatprep.subr.mxu0 0.0
    %541 = vmatpush1.msra.mxu0 0.0
    %542 = vmatprep.subr.mxu0 0.0
    %543 = vmatpush1.msra.mxu0 0.0
    %544 = vmatprep.subr.mxu0 %v53
    %545 = vmatpush1.msra.mxu0 %v52
    %546 = vmatprep.subr.mxu0 %v51
    %547 = vmatpush1.msra.mxu0 %v50
    %548 = vmatprep.subr.mxu0 %v49
    %549 = vmatpush1.msra.mxu0 %v48
    %550 = vmatprep.subr.mxu0 %v47
    %551 = vmatpush1.msra.mxu0 %v46
    %552 = vmatprep.subr.mxu0 %v45
    %553 = vmatpush1.msra.mxu0 %v44
    %554 = vmatprep.subr.mxu0 %v43
    %555 = vmatpush1.msra.mxu0 %v42
    %556 = vmatprep.subr.mxu0 %v41
    %557 = vmatpush1.msra.mxu0 %v40
    %558 = vmatprep.subr.mxu0 %v39
    %559 = vmatpush1.msra.mxu0 %v38
    %560 = vmatprep.subr.mxu0 0.0
    %561 = vmatpush2.msra.mxu0 0.0
    %562 = vmatprep.subr.mxu0 0.0
    %563 = vmatpush2.msra.mxu0 0.0
    %564 = vmatprep.subr.mxu0 0.0
    %565 = vmatpush2.msra.mxu0 0.0
    %566 = vmatprep.subr.mxu0 0.0
    %567 = vmatpush2.msra.mxu0 0.0
    %568 = vmatprep.subr.mxu0 0.0
    %569 = vmatpush2.msra.mxu0 0.0
    %570 = vmatprep.subr.mxu0 0.0
    %571 = vmatpush2.msra.mxu0 0.0
    %572 = vmatprep.subr.mxu0 0.0
    %573 = vmatpush2.msra.mxu0 0.0
    %574 = vmatprep.subr.mxu0 0.0
    %575 = vmatpush2.msra.mxu0 0.0
    %576 = vmatprep.subr.mxu0 0.0
    %577 = vmatpush2.msra.mxu0 0.0
    %578 = vmatprep.subr.mxu0 0.0
    %579 = vmatpush2.msra.mxu0 0.0
    %580 = vmatprep.subr.mxu0 0.0
    %581 = vmatpush2.msra.mxu0 0.0
    %582 = vmatprep.subr.mxu0 0.0
    %583 = vmatpush2.msra.mxu0 0.0
    %584 = vmatprep.subr.mxu0 0.0
    %585 = vmatpush2.msra.mxu0 0.0
    %586 = vmatprep.subr.mxu0 0.0
    %587 = vmatpush2.msra.mxu0 0.0
    %588 = vmatprep.subr.mxu0 0.0
    %589 = vmatpush2.msra.mxu0 0.0
    %590 = vmatprep.subr.mxu0 0.0
    %591 = vmatpush2.msra.mxu0 0.0
    %592 = vmatprep.mubr.f32.mxu0 0.0
    %593 = vmatmul.mubr.f32.gmra.mxu0 %v526
    %v594 = vpop.f32.mrf.mxu0
    %v595 = vadd.f32 0.0, %v594
    %v596 = vpop.f32.mrf.mxu0
    %v597 = vadd.f32 0.0, %v596
    %598 = vdwg.mxu0
    %v599 = vld [vmem:[#allocation2 + $0x18] sm:$0xff]
    %v600 = vadd.f32 %v599, %v595
    %v601 = vxor.u32 %v600, 2147483648
    %v602 = vmul.f32 %v601, 1.442695
    %v603 = vpow.pop %v602
    %v604 = vadd.f32 %v603, 1.0
    %v605 = vrcp.pop %v604
    %v606 = vmul.f32 1.0, %v605
    %v607 = vtanh.pop %v600
    %v608 = vmul.f32 %v606, %v480
    %610 = vrot.lane.b32.xlu0 %v607, 64
    %v611 = vpop.permute.xlu0 %610
    %v613 = vmul.f32 %v606, %v611
    %615 = vrot.lane.b32.xlu0 %v613, 32
    %v616 = vpop.permute.xlu0 %615
    %v618 = vadd.f32 %v608, %v616
    %v619 = vtanh.pop %v618
    %621 = vrot.lane.b32.xlu0 %v619, 64
    %v622 = vpop.permute.xlu0 %621
    %v624 = vmul.f32 %v606, %v622
    %v625 = vadd.f32 %v597, %v348
    %v626 = vxor.u32 %v625, 2147483648
    %v627 = vmul.f32 %v626, 1.442695
    %v628 = vpow.pop %v627
    %v629 = vadd.f32 %v628, 1.0
    %v630 = vrcp.pop %v629
    %v631 = vmul.f32 1.0, %v630
    %v632 = vtanh.pop %v625
    %v633 = vmul.f32 %v631, %v505
    %635 = vrot.lane.b32.xlu0 %v632, 64
    %v636 = vpop.permute.xlu0 %635
    %v638 = vmul.f32 %v631, %v636
    %640 = vrot.lane.b32.xlu0 %v638, 32
    %v641 = vpop.permute.xlu0 %640
    %v643 = vadd.f32 %v633, %v641
    %v644 = vtanh.pop %v643
    %646 = vrot.lane.b32.xlu0 %v644, 64
    %v647 = vpop.permute.xlu0 %646
    %v649 = vmul.f32 %v631, %v647
    %651 = vrot.lane.b32.xlu0 %v649, 32
    %v652 = vpop.permute.xlu0 %651
    %654 = vst.msk [vmem:[#allocation3 + $0x10] sm:$0xff] %vm67, %v652
    %656 = vrot.lane.b32.xlu0 %v624, 32
    %v657 = vpop.permute.xlu0 %656
    %659 = vrot.lane.b32.xlu0 %v649, 64
    %v660 = vpop.permute.xlu0 %659
    %v662 = vsel %vm67, %v657, %v660
    %v664 = vsel %vm244, %v662, 0
    %666 = vmatprep.subr.mxu0 0.0
    %667 = vmatpush1.msra.mxu0 0.0
    %668 = vmatprep.subr.mxu0 0.0
    %669 = vmatpush1.msra.mxu0 0.0
    %670 = vmatprep.subr.mxu0 0.0
    %671 = vmatpush1.msra.mxu0 0.0
    %672 = vmatprep.subr.mxu0 0.0
    %673 = vmatpush1.msra.mxu0 0.0
    %674 = vmatprep.subr.mxu0 0.0
    %675 = vmatpush1.msra.mxu0 0.0
    %676 = vmatprep.subr.mxu0 0.0
    %677 = vmatpush1.msra.mxu0 0.0
    %678 = vmatprep.subr.mxu0 0.0
    %679 = vmatpush1.msra.mxu0 0.0
    %680 = vmatprep.subr.mxu0 0.0
    %681 = vmatpush1.msra.mxu0 0.0
    %682 = vmatprep.subr.mxu0 %v53
    %683 = vmatpush1.msra.mxu0 %v52
    %684 = vmatprep.subr.mxu0 %v51
    %685 = vmatpush1.msra.mxu0 %v50
    %686 = vmatprep.subr.mxu0 %v49
    %687 = vmatpush1.msra.mxu0 %v48
    %688 = vmatprep.subr.mxu0 %v47
    %689 = vmatpush1.msra.mxu0 %v46
    %690 = vmatprep.subr.mxu0 %v45
    %691 = vmatpush1.msra.mxu0 %v44
    %692 = vmatprep.subr.mxu0 %v43
    %693 = vmatpush1.msra.mxu0 %v42
    %694 = vmatprep.subr.mxu0 %v41
    %695 = vmatpush1.msra.mxu0 %v40
    %696 = vmatprep.subr.mxu0 %v39
    %697 = vmatpush1.msra.mxu0 %v38
    %698 = vmatprep.subr.mxu0 0.0
    %699 = vmatpush2.msra.mxu0 0.0
    %700 = vmatprep.subr.mxu0 0.0
    %701 = vmatpush2.msra.mxu0 0.0
    %702 = vmatprep.subr.mxu0 0.0
    %703 = vmatpush2.msra.mxu0 0.0
    %704 = vmatprep.subr.mxu0 0.0
    %705 = vmatpush2.msra.mxu0 0.0
    %706 = vmatprep.subr.mxu0 0.0
    %707 = vmatpush2.msra.mxu0 0.0
    %708 = vmatprep.subr.mxu0 0.0
    %709 = vmatpush2.msra.mxu0 0.0
    %710 = vmatprep.subr.mxu0 0.0
    %711 = vmatpush2.msra.mxu0 0.0
    %712 = vmatprep.subr.mxu0 0.0
    %713 = vmatpush2.msra.mxu0 0.0
    %714 = vmatprep.subr.mxu0 0.0
    %715 = vmatpush2.msra.mxu0 0.0
    %716 = vmatprep.subr.mxu0 0.0
    %717 = vmatpush2.msra.mxu0 0.0
    %718 = vmatprep.subr.mxu0 0.0
    %719 = vmatpush2.msra.mxu0 0.0
    %720 = vmatprep.subr.mxu0 0.0
    %721 = vmatpush2.msra.mxu0 0.0
    %722 = vmatprep.subr.mxu0 0.0
    %723 = vmatpush2.msra.mxu0 0.0
    %724 = vmatprep.subr.mxu0 0.0
    %725 = vmatpush2.msra.mxu0 0.0
    %726 = vmatprep.subr.mxu0 0.0
    %727 = vmatpush2.msra.mxu0 0.0
    %728 = vmatprep.subr.mxu0 0.0
    %729 = vmatpush2.msra.mxu0 0.0
    %730 = vmatprep.mubr.f32.mxu0 0.0
    %731 = vmatmul.mubr.f32.gmra.mxu0 %v664
    %v732 = vpop.f32.mrf.mxu0
    %v733 = vadd.f32 0.0, %v732
    %v734 = vpop.f32.mrf.mxu0
    %v735 = vadd.f32 0.0, %v734
    %736 = vdwg.mxu0
    %v737 = vld [vmem:[#allocation2 + $0x20] sm:$0xff]
    %v738 = vadd.f32 %v737, %v733
    %v739 = vxor.u32 %v738, 2147483648
    %v740 = vmul.f32 %v739, 1.442695
    %v741 = vpow.pop %v740
    %v742 = vadd.f32 %v741, 1.0
    %v743 = vrcp.pop %v742
    %v744 = vmul.f32 1.0, %v743
    %v745 = vtanh.pop %v738
    %v746 = vmul.f32 %v744, %v618
    %748 = vrot.lane.b32.xlu0 %v745, 64
    %v749 = vpop.permute.xlu0 %748
    %v751 = vmul.f32 %v744, %v749
    %753 = vrot.lane.b32.xlu0 %v751, 32
    %v754 = vpop.permute.xlu0 %753
    %v756 = vadd.f32 %v746, %v754
    %v757 = vtanh.pop %v756
    %759 = vrot.lane.b32.xlu0 %v757, 64
    %v760 = vpop.permute.xlu0 %759
    %v762 = vmul.f32 %v744, %v760
    %v763 = vadd.f32 %v735, %v348
    %v764 = vxor.u32 %v763, 2147483648
    %v765 = vmul.f32 %v764, 1.442695
    %v766 = vpow.pop %v765
    %v767 = vadd.f32 %v766, 1.0
    %v768 = vrcp.pop %v767
    %v769 = vmul.f32 1.0, %v768
    %v770 = vtanh.pop %v763
    %v771 = vmul.f32 %v769, %v643
    %773 = vrot.lane.b32.xlu0 %v770, 64
    %v774 = vpop.permute.xlu0 %773
    %v776 = vmul.f32 %v769, %v774
    %778 = vrot.lane.b32.xlu0 %v776, 32
    %v779 = vpop.permute.xlu0 %778
    %v781 = vadd.f32 %v771, %v779
    %v782 = vtanh.pop %v781
    %784 = vrot.lane.b32.xlu0 %v782, 64
    %v785 = vpop.permute.xlu0 %784
    %v787 = vmul.f32 %v769, %v785
    %789 = vrot.lane.b32.xlu0 %v787, 32
    %v790 = vpop.permute.xlu0 %789
    %792 = vst.msk [vmem:[#allocation3 + $0x18] sm:$0xff] %vm67, %v790
    %794 = vrot.lane.b32.xlu0 %v762, 32
    %v795 = vpop.permute.xlu0 %794
    %797 = vrot.lane.b32.xlu0 %v787, 64
    %v798 = vpop.permute.xlu0 %797
    %v800 = vsel %vm67, %v795, %v798
    %v802 = vsel %vm244, %v800, 0
    %804 = vmatprep.subr.mxu0 0.0
    %805 = vmatpush1.msra.mxu0 0.0
    %806 = vmatprep.subr.mxu0 0.0
    %807 = vmatpush1.msra.mxu0 0.0
    %808 = vmatprep.subr.mxu0 0.0
    %809 = vmatpush1.msra.mxu0 0.0
    %810 = vmatprep.subr.mxu0 0.0
    %811 = vmatpush1.msra.mxu0 0.0
    %812 = vmatprep.subr.mxu0 0.0
    %813 = vmatpush1.msra.mxu0 0.0
    %814 = vmatprep.subr.mxu0 0.0
    %815 = vmatpush1.msra.mxu0 0.0
    %816 = vmatprep.subr.mxu0 0.0
    %817 = vmatpush1.msra.mxu0 0.0
    %818 = vmatprep.subr.mxu0 0.0
    %819 = vmatpush1.msra.mxu0 0.0
    %820 = vmatprep.subr.mxu0 %v53
    %821 = vmatpush1.msra.mxu0 %v52
    %822 = vmatprep.subr.mxu0 %v51
    %823 = vmatpush1.msra.mxu0 %v50
    %824 = vmatprep.subr.mxu0 %v49
    %825 = vmatpush1.msra.mxu0 %v48
    %826 = vmatprep.subr.mxu0 %v47
    %827 = vmatpush1.msra.mxu0 %v46
    %828 = vmatprep.subr.mxu0 %v45
    %829 = vmatpush1.msra.mxu0 %v44
    %830 = vmatprep.subr.mxu0 %v43
    %831 = vmatpush1.msra.mxu0 %v42
    %832 = vmatprep.subr.mxu0 %v41
    %833 = vmatpush1.msra.mxu0 %v40
    %834 = vmatprep.subr.mxu0 %v39
    %835 = vmatpush1.msra.mxu0 %v38
    %836 = vmatprep.subr.mxu0 0.0
    %837 = vmatpush2.msra.mxu0 0.0
    %838 = vmatprep.subr.mxu0 0.0
    %839 = vmatpush2.msra.mxu0 0.0
    %840 = vmatprep.subr.mxu0 0.0
    %841 = vmatpush2.msra.mxu0 0.0
    %842 = vmatprep.subr.mxu0 0.0
    %843 = vmatpush2.msra.mxu0 0.0
    %844 = vmatprep.subr.mxu0 0.0
    %845 = vmatpush2.msra.mxu0 0.0
    %846 = vmatprep.subr.mxu0 0.0
    %847 = vmatpush2.msra.mxu0 0.0
    %848 = vmatprep.subr.mxu0 0.0
    %849 = vmatpush2.msra.mxu0 0.0
    %850 = vmatprep.subr.mxu0 0.0
    %851 = vmatpush2.msra.mxu0 0.0
    %852 = vmatprep.subr.mxu0 0.0
    %853 = vmatpush2.msra.mxu0 0.0
    %854 = vmatprep.subr.mxu0 0.0
    %855 = vmatpush2.msra.mxu0 0.0
    %856 = vmatprep.subr.mxu0 0.0
    %857 = vmatpush2.msra.mxu0 0.0
    %858 = vmatprep.subr.mxu0 0.0
    %859 = vmatpush2.msra.mxu0 0.0
    %860 = vmatprep.subr.mxu0 0.0
    %861 = vmatpush2.msra.mxu0 0.0
    %862 = vmatprep.subr.mxu0 0.0
    %863 = vmatpush2.msra.mxu0 0.0
    %864 = vmatprep.subr.mxu0 0.0
    %865 = vmatpush2.msra.mxu0 0.0
    %866 = vmatprep.subr.mxu0 0.0
    %867 = vmatpush2.msra.mxu0 0.0
    %868 = vmatprep.mubr.f32.mxu0 0.0
    %869 = vmatmul.mubr.f32.gmra.mxu0 %v802
    %v870 = vpop.f32.mrf.mxu0
    %v871 = vadd.f32 0.0, %v870
    %v872 = vpop.f32.mrf.mxu0
    %v873 = vadd.f32 0.0, %v872
    %874 = vdwg.mxu0
    %v875 = vld [vmem:[#allocation2 + $0x28] sm:$0xff]
    %v876 = vadd.f32 %v875, %v871
    %v877 = vxor.u32 %v876, 2147483648
    %v878 = vmul.f32 %v877, 1.442695
    %v879 = vpow.pop %v878
    %v880 = vadd.f32 %v879, 1.0
    %v881 = vrcp.pop %v880
    %v882 = vmul.f32 1.0, %v881
    %v883 = vtanh.pop %v876
    %v884 = vmul.f32 %v882, %v756
    %886 = vrot.lane.b32.xlu0 %v883, 64
    %v887 = vpop.permute.xlu0 %886
    %v889 = vmul.f32 %v882, %v887
    %891 = vrot.lane.b32.xlu0 %v889, 32
    %v892 = vpop.permute.xlu0 %891
    %v894 = vadd.f32 %v884, %v892
    %v895 = vtanh.pop %v894
    %897 = vrot.lane.b32.xlu0 %v895, 64
    %v898 = vpop.permute.xlu0 %897
    %v900 = vmul.f32 %v882, %v898
    %v901 = vadd.f32 %v873, %v348
    %v902 = vxor.u32 %v901, 2147483648
    %v903 = vmul.f32 %v902, 1.442695
    %v904 = vpow.pop %v903
    %v905 = vadd.f32 %v904, 1.0
    %v906 = vrcp.pop %v905
    %v907 = vmul.f32 1.0, %v906
    %v908 = vtanh.pop %v901
    %v909 = vmul.f32 %v907, %v781
    %911 = vrot.lane.b32.xlu0 %v908, 64
    %v912 = vpop.permute.xlu0 %911
    %v914 = vmul.f32 %v907, %v912
    %916 = vrot.lane.b32.xlu0 %v914, 32
    %v917 = vpop.permute.xlu0 %916
    %v919 = vadd.f32 %v909, %v917
    %v920 = vtanh.pop %v919
    %922 = vrot.lane.b32.xlu0 %v920, 64
    %v923 = vpop.permute.xlu0 %922
    %v925 = vmul.f32 %v907, %v923
    %927 = vrot.lane.b32.xlu0 %v925, 32
    %v928 = vpop.permute.xlu0 %927
    %930 = vst.msk [vmem:[#allocation3 + $0x20] sm:$0xff] %vm67, %v928
    %932 = vrot.lane.b32.xlu0 %v900, 32
    %v933 = vpop.permute.xlu0 %932
    %935 = vrot.lane.b32.xlu0 %v925, 64
    %v936 = vpop.permute.xlu0 %935
    %v938 = vsel %vm67, %v933, %v936
    %v940 = vsel %vm244, %v938, 0
    %942 = vmatprep.subr.mxu0 0.0
    %943 = vmatpush1.msra.mxu0 0.0
    %944 = vmatprep.subr.mxu0 0.0
    %945 = vmatpush1.msra.mxu0 0.0
    %946 = vmatprep.subr.mxu0 0.0
    %947 = vmatpush1.msra.mxu0 0.0
    %948 = vmatprep.subr.mxu0 0.0
    %949 = vmatpush1.msra.mxu0 0.0
    %950 = vmatprep.subr.mxu0 0.0
    %951 = vmatpush1.msra.mxu0 0.0
    %952 = vmatprep.subr.mxu0 0.0
    %953 = vmatpush1.msra.mxu0 0.0
    %954 = vmatprep.subr.mxu0 0.0
    %955 = vmatpush1.msra.mxu0 0.0
    %956 = vmatprep.subr.mxu0 0.0
    %957 = vmatpush1.msra.mxu0 0.0
    %958 = vmatprep.subr.mxu0 %v53
    %959 = vmatpush1.msra.mxu0 %v52
    %960 = vmatprep.subr.mxu0 %v51
    %961 = vmatpush1.msra.mxu0 %v50
    %962 = vmatprep.subr.mxu0 %v49
    %963 = vmatpush1.msra.mxu0 %v48
    %964 = vmatprep.subr.mxu0 %v47
    %965 = vmatpush1.msra.mxu0 %v46
    %966 = vmatprep.subr.mxu0 %v45
    %967 = vmatpush1.msra.mxu0 %v44
    %968 = vmatprep.subr.mxu0 %v43
    %969 = vmatpush1.msra.mxu0 %v42
    %970 = vmatprep.subr.mxu0 %v41
    %971 = vmatpush1.msra.mxu0 %v40
    %972 = vmatprep.subr.mxu0 %v39
    %973 = vmatpush1.msra.mxu0 %v38
    %974 = vmatprep.subr.mxu0 0.0
    %975 = vmatpush2.msra.mxu0 0.0
    %976 = vmatprep.subr.mxu0 0.0
    %977 = vmatpush2.msra.mxu0 0.0
    %978 = vmatprep.subr.mxu0 0.0
    %979 = vmatpush2.msra.mxu0 0.0
    %980 = vmatprep.subr.mxu0 0.0
    %981 = vmatpush2.msra.mxu0 0.0
    %982 = vmatprep.subr.mxu0 0.0
    %983 = vmatpush2.msra.mxu0 0.0
    %984 = vmatprep.subr.mxu0 0.0
    %985 = vmatpush2.msra.mxu0 0.0
    %986 = vmatprep.subr.mxu0 0.0
    %987 = vmatpush2.msra.mxu0 0.0
    %988 = vmatprep.subr.mxu0 0.0
    %989 = vmatpush2.msra.mxu0 0.0
    %990 = vmatprep.subr.mxu0 0.0
    %991 = vmatpush2.msra.mxu0 0.0
    %992 = vmatprep.subr.mxu0 0.0
    %993 = vmatpush2.msra.mxu0 0.0
    %994 = vmatprep.subr.mxu0 0.0
    %995 = vmatpush2.msra.mxu0 0.0
    %996 = vmatprep.subr.mxu0 0.0
    %997 = vmatpush2.msra.mxu0 0.0
    %998 = vmatprep.subr.mxu0 0.0
    %999 = vmatpush2.msra.mxu0 0.0
    %1000 = vmatprep.subr.mxu0 0.0
    %1001 = vmatpush2.msra.mxu0 0.0
    %1002 = vmatprep.subr.mxu0 0.0
    %1003 = vmatpush2.msra.mxu0 0.0
    %1004 = vmatprep.subr.mxu0 0.0
    %1005 = vmatpush2.msra.mxu0 0.0
    %1006 = vmatprep.mubr.f32.mxu0 0.0
    %1007 = vmatmul.mubr.f32.gmra.mxu0 %v940
    %v1008 = vpop.f32.mrf.mxu0
    %v1009 = vadd.f32 0.0, %v1008
    %v1010 = vpop.f32.mrf.mxu0
    %v1011 = vadd.f32 0.0, %v1010
    %1012 = vdwg.mxu0
    %v1013 = vld [vmem:[#allocation2 + $0x30] sm:$0xff]
    %v1014 = vadd.f32 %v1013, %v1009
    %v1015 = vxor.u32 %v1014, 2147483648
    %v1016 = vmul.f32 %v1015, 1.442695
    %v1017 = vpow.pop %v1016
    %v1018 = vadd.f32 %v1017, 1.0
    %v1019 = vrcp.pop %v1018
    %v1020 = vmul.f32 1.0, %v1019
    %v1021 = vtanh.pop %v1014
    %v1022 = vmul.f32 %v1020, %v894
    %1024 = vrot.lane.b32.xlu0 %v1021, 64
    %v1025 = vpop.permute.xlu0 %1024
    %v1027 = vmul.f32 %v1020, %v1025
    %1029 = vrot.lane.b32.xlu0 %v1027, 32
    %v1030 = vpop.permute.xlu0 %1029
    %v1032 = vadd.f32 %v1022, %v1030
    %v1033 = vtanh.pop %v1032
    %1035 = vrot.lane.b32.xlu0 %v1033, 64
    %v1036 = vpop.permute.xlu0 %1035
    %v1038 = vmul.f32 %v1020, %v1036
    %v1039 = vadd.f32 %v1011, %v348
    %v1040 = vxor.u32 %v1039, 2147483648
    %v1041 = vmul.f32 %v1040, 1.442695
    %v1042 = vpow.pop %v1041
    %v1043 = vadd.f32 %v1042, 1.0
    %v1044 = vrcp.pop %v1043
    %v1045 = vmul.f32 1.0, %v1044
    %v1046 = vtanh.pop %v1039
    %v1047 = vmul.f32 %v1045, %v919
    %1049 = vrot.lane.b32.xlu0 %v1046, 64
    %v1050 = vpop.permute.xlu0 %1049
    %v1052 = vmul.f32 %v1045, %v1050
    %1054 = vrot.lane.b32.xlu0 %v1052, 32
    %v1055 = vpop.permute.xlu0 %1054
    %v1057 = vadd.f32 %v1047, %v1055
    %v1058 = vtanh.pop %v1057
    %1060 = vrot.lane.b32.xlu0 %v1058, 64
    %v1061 = vpop.permute.xlu0 %1060
    %v1063 = vmul.f32 %v1045, %v1061
    %1065 = vrot.lane.b32.xlu0 %v1063, 32
    %v1066 = vpop.permute.xlu0 %1065
    %1068 = vst.msk [vmem:[#allocation3 + $0x28] sm:$0xff] %vm67, %v1066
    %1070 = vrot.lane.b32.xlu0 %v1038, 32
    %v1071 = vpop.permute.xlu0 %1070
    %1073 = vrot.lane.b32.xlu0 %v1063, 64
    %v1074 = vpop.permute.xlu0 %1073
    %v1076 = vsel %vm67, %v1071, %v1074
    %v1078 = vsel %vm244, %v1076, 0
    %1080 = vmatprep.subr.mxu0 0.0
    %1081 = vmatpush1.msra.mxu0 0.0
    %1082 = vmatprep.subr.mxu0 0.0
    %1083 = vmatpush1.msra.mxu0 0.0
    %1084 = vmatprep.subr.mxu0 0.0
    %1085 = vmatpush1.msra.mxu0 0.0
    %1086 = vmatprep.subr.mxu0 0.0
    %1087 = vmatpush1.msra.mxu0 0.0
    %1088 = vmatprep.subr.mxu0 0.0
    %1089 = vmatpush1.msra.mxu0 0.0
    %1090 = vmatprep.subr.mxu0 0.0
    %1091 = vmatpush1.msra.mxu0 0.0
    %1092 = vmatprep.subr.mxu0 0.0
    %1093 = vmatpush1.msra.mxu0 0.0
    %1094 = vmatprep.subr.mxu0 0.0
    %1095 = vmatpush1.msra.mxu0 0.0
    %1096 = vmatprep.subr.mxu0 %v53
    %1097 = vmatpush1.msra.mxu0 %v52
    %1098 = vmatprep.subr.mxu0 %v51
    %1099 = vmatpush1.msra.mxu0 %v50
    %1100 = vmatprep.subr.mxu0 %v49
    %1101 = vmatpush1.msra.mxu0 %v48
    %1102 = vmatprep.subr.mxu0 %v47
    %1103 = vmatpush1.msra.mxu0 %v46
    %1104 = vmatprep.subr.mxu0 %v45
    %1105 = vmatpush1.msra.mxu0 %v44
    %1106 = vmatprep.subr.mxu0 %v43
    %1107 = vmatpush1.msra.mxu0 %v42
    %1108 = vmatprep.subr.mxu0 %v41
    %1109 = vmatpush1.msra.mxu0 %v40
    %1110 = vmatprep.subr.mxu0 %v39
    %1111 = vmatpush1.msra.mxu0 %v38
    %1112 = vmatprep.subr.mxu0 0.0
    %1113 = vmatpush2.msra.mxu0 0.0
    %1114 = vmatprep.subr.mxu0 0.0
    %1115 = vmatpush2.msra.mxu0 0.0
    %1116 = vmatprep.subr.mxu0 0.0
    %1117 = vmatpush2.msra.mxu0 0.0
    %1118 = vmatprep.subr.mxu0 0.0
    %1119 = vmatpush2.msra.mxu0 0.0
    %1120 = vmatprep.subr.mxu0 0.0
    %1121 = vmatpush2.msra.mxu0 0.0
    %1122 = vmatprep.subr.mxu0 0.0
    %1123 = vmatpush2.msra.mxu0 0.0
    %1124 = vmatprep.subr.mxu0 0.0
    %1125 = vmatpush2.msra.mxu0 0.0
    %1126 = vmatprep.subr.mxu0 0.0
    %1127 = vmatpush2.msra.mxu0 0.0
    %1128 = vmatprep.subr.mxu0 0.0
    %1129 = vmatpush2.msra.mxu0 0.0
    %1130 = vmatprep.subr.mxu0 0.0
    %1131 = vmatpush2.msra.mxu0 0.0
    %1132 = vmatprep.subr.mxu0 0.0
    %1133 = vmatpush2.msra.mxu0 0.0
    %1134 = vmatprep.subr.mxu0 0.0
    %1135 = vmatpush2.msra.mxu0 0.0
    %1136 = vmatprep.subr.mxu0 0.0
    %1137 = vmatpush2.msra.mxu0 0.0
    %1138 = vmatprep.subr.mxu0 0.0
    %1139 = vmatpush2.msra.mxu0 0.0
    %1140 = vmatprep.subr.mxu0 0.0
    %1141 = vmatpush2.msra.mxu0 0.0
    %1142 = vmatprep.subr.mxu0 0.0
    %1143 = vmatpush2.msra.mxu0 0.0
    %1144 = vmatprep.mubr.f32.mxu0 0.0
    %1145 = vmatmul.mubr.f32.gmra.mxu0 %v1078
    %v1146 = vpop.f32.mrf.mxu0
    %v1147 = vadd.f32 0.0, %v1146
    %v1148 = vpop.f32.mrf.mxu0
    %v1149 = vadd.f32 0.0, %v1148
    %1150 = vdwg.mxu0
    %v1151 = vld [vmem:[#allocation2 + $0x38] sm:$0xff]
    %v1152 = vadd.f32 %v1151, %v1147
    %v1153 = vxor.u32 %v1152, 2147483648
    %v1154 = vmul.f32 %v1153, 1.442695
    %v1155 = vpow.pop %v1154
    %v1156 = vadd.f32 %v1155, 1.0
    %v1157 = vrcp.pop %v1156
    %v1158 = vmul.f32 1.0, %v1157
    %v1159 = vtanh.pop %v1152
    %v1160 = vmul.f32 %v1158, %v1032
    %1162 = vrot.lane.b32.xlu0 %v1159, 64
    %v1163 = vpop.permute.xlu0 %1162
    %v1165 = vmul.f32 %v1158, %v1163
    %1167 = vrot.lane.b32.xlu0 %v1165, 32
    %v1168 = vpop.permute.xlu0 %1167
    %v1170 = vadd.f32 %v1160, %v1168
    %v1171 = vtanh.pop %v1170
    %1173 = vrot.lane.b32.xlu0 %v1171, 64
    %v1174 = vpop.permute.xlu0 %1173
    %v1176 = vmul.f32 %v1158, %v1174
    %v1177 = vadd.f32 %v1149, %v348
    %v1178 = vxor.u32 %v1177, 2147483648
    %v1179 = vmul.f32 %v1178, 1.442695
    %v1180 = vpow.pop %v1179
    %v1181 = vadd.f32 %v1180, 1.0
    %v1182 = vrcp.pop %v1181
    %v1183 = vmul.f32 1.0, %v1182
    %v1184 = vtanh.pop %v1177
    %v1185 = vmul.f32 %v1183, %v1057
    %1187 = vrot.lane.b32.xlu0 %v1184, 64
    %v1188 = vpop.permute.xlu0 %1187
    %v1190 = vmul.f32 %v1183, %v1188
    %1192 = vrot.lane.b32.xlu0 %v1190, 32
    %v1193 = vpop.permute.xlu0 %1192
    %v1195 = vadd.f32 %v1185, %v1193
    %v1196 = vtanh.pop %v1195
    %1198 = vrot.lane.b32.xlu0 %v1196, 64
    %v1199 = vpop.permute.xlu0 %1198
    %v1201 = vmul.f32 %v1183, %v1199
    %1203 = vrot.lane.b32.xlu0 %v1201, 32
    %v1204 = vpop.permute.xlu0 %1203
    %1206 = vst.msk [vmem:[#allocation3 + $0x30] sm:$0xff] %vm67, %v1204
    %1208 = vrot.lane.b32.xlu0 %v1176, 32
    %v1209 = vpop.permute.xlu0 %1208
    %1211 = vrot.lane.b32.xlu0 %v1201, 64
    %v1212 = vpop.permute.xlu0 %1211
    %v1214 = vsel %vm67, %v1209, %v1212
    %v1216 = vsel %vm244, %v1214, 0
    %1218 = vmatprep.subr.mxu0 0.0
    %1219 = vmatpush1.msra.mxu0 0.0
    %1220 = vmatprep.subr.mxu0 0.0
    %1221 = vmatpush1.msra.mxu0 0.0
    %1222 = vmatprep.subr.mxu0 0.0
    %1223 = vmatpush1.msra.mxu0 0.0
    %1224 = vmatprep.subr.mxu0 0.0
    %1225 = vmatpush1.msra.mxu0 0.0
    %1226 = vmatprep.subr.mxu0 0.0
    %1227 = vmatpush1.msra.mxu0 0.0
    %1228 = vmatprep.subr.mxu0 0.0
    %1229 = vmatpush1.msra.mxu0 0.0
    %1230 = vmatprep.subr.mxu0 0.0
    %1231 = vmatpush1.msra.mxu0 0.0
    %1232 = vmatprep.subr.mxu0 0.0
    %1233 = vmatpush1.msra.mxu0 0.0
    %1234 = vmatprep.subr.mxu0 %v53
    %1235 = vmatpush1.msra.mxu0 %v52
    %1236 = vmatprep.subr.mxu0 %v51
    %1237 = vmatpush1.msra.mxu0 %v50
    %1238 = vmatprep.subr.mxu0 %v49
    %1239 = vmatpush1.msra.mxu0 %v48
    %1240 = vmatprep.subr.mxu0 %v47
    %1241 = vmatpush1.msra.mxu0 %v46
    %1242 = vmatprep.subr.mxu0 %v45
    %1243 = vmatpush1.msra.mxu0 %v44
    %1244 = vmatprep.subr.mxu0 %v43
    %1245 = vmatpush1.msra.mxu0 %v42
    %1246 = vmatprep.subr.mxu0 %v41
    %1247 = vmatpush1.msra.mxu0 %v40
    %1248 = vmatprep.subr.mxu0 %v39
    %1249 = vmatpush1.msra.mxu0 %v38
    %1250 = vmatprep.subr.mxu0 0.0
    %1251 = vmatpush2.msra.mxu0 0.0
    %1252 = vmatprep.subr.mxu0 0.0
    %1253 = vmatpush2.msra.mxu0 0.0
    %1254 = vmatprep.subr.mxu0 0.0
    %1255 = vmatpush2.msra.mxu0 0.0
    %1256 = vmatprep.subr.mxu0 0.0
    %1257 = vmatpush2.msra.mxu0 0.0
    %1258 = vmatprep.subr.mxu0 0.0
    %1259 = vmatpush2.msra.mxu0 0.0
    %1260 = vmatprep.subr.mxu0 0.0
    %1261 = vmatpush2.msra.mxu0 0.0
    %1262 = vmatprep.subr.mxu0 0.0
    %1263 = vmatpush2.msra.mxu0 0.0
    %1264 = vmatprep.subr.mxu0 0.0
    %1265 = vmatpush2.msra.mxu0 0.0
    %1266 = vmatprep.subr.mxu0 0.0
    %1267 = vmatpush2.msra.mxu0 0.0
    %1268 = vmatprep.subr.mxu0 0.0
    %1269 = vmatpush2.msra.mxu0 0.0
    %1270 = vmatprep.subr.mxu0 0.0
    %1271 = vmatpush2.msra.mxu0 0.0
    %1272 = vmatprep.subr.mxu0 0.0
    %1273 = vmatpush2.msra.mxu0 0.0
    %1274 = vmatprep.subr.mxu0 0.0
    %1275 = vmatpush2.msra.mxu0 0.0
    %1276 = vmatprep.subr.mxu0 0.0
    %1277 = vmatpush2.msra.mxu0 0.0
    %1278 = vmatprep.subr.mxu0 0.0
    %1279 = vmatpush2.msra.mxu0 0.0
    %1280 = vmatprep.subr.mxu0 0.0
    %1281 = vmatpush2.msra.mxu0 0.0
    %1282 = vmatprep.mubr.f32.mxu0 0.0
    %1283 = vmatmul.mubr.f32.gmra.mxu0 %v1216
    %v1284 = vpop.f32.mrf.mxu0
    %v1285 = vadd.f32 0.0, %v1284
    %v1286 = vpop.f32.mrf.mxu0
    %v1287 = vadd.f32 0.0, %v1286
    %1288 = vdwg.mxu0
    %v1289 = vld [vmem:[#allocation2 + $0x40] sm:$0xff]
    %v1290 = vadd.f32 %v1289, %v1285
    %v1291 = vxor.u32 %v1290, 2147483648
    %v1292 = vmul.f32 %v1291, 1.442695
    %v1293 = vpow.pop %v1292
    %v1294 = vadd.f32 %v1293, 1.0
    %v1295 = vrcp.pop %v1294
    %v1296 = vmul.f32 1.0, %v1295
    %v1297 = vtanh.pop %v1290
    %v1298 = vmul.f32 %v1296, %v1170
    %1300 = vrot.lane.b32.xlu0 %v1297, 64
    %v1301 = vpop.permute.xlu0 %1300
    %v1303 = vmul.f32 %v1296, %v1301
    %1305 = vrot.lane.b32.xlu0 %v1303, 32
    %v1306 = vpop.permute.xlu0 %1305
    %v1308 = vadd.f32 %v1298, %v1306
    %v1309 = vtanh.pop %v1308
    %1311 = vrot.lane.b32.xlu0 %v1309, 64
    %v1312 = vpop.permute.xlu0 %1311
    %v1314 = vmul.f32 %v1296, %v1312
    %v1315 = vadd.f32 %v1287, %v348
    %v1316 = vxor.u32 %v1315, 2147483648
    %v1317 = vmul.f32 %v1316, 1.442695
    %v1318 = vpow.pop %v1317
    %v1319 = vadd.f32 %v1318, 1.0
    %v1320 = vrcp.pop %v1319
    %v1321 = vmul.f32 1.0, %v1320
    %v1322 = vtanh.pop %v1315
    %v1323 = vmul.f32 %v1321, %v1195
    %1325 = vrot.lane.b32.xlu0 %v1322, 64
    %v1326 = vpop.permute.xlu0 %1325
    %v1328 = vmul.f32 %v1321, %v1326
    %1330 = vrot.lane.b32.xlu0 %v1328, 32
    %v1331 = vpop.permute.xlu0 %1330
    %v1333 = vadd.f32 %v1323, %v1331
    %v1334 = vtanh.pop %v1333
    %1336 = vrot.lane.b32.xlu0 %v1334, 64
    %v1337 = vpop.permute.xlu0 %1336
    %v1339 = vmul.f32 %v1321, %v1337
    %1341 = vrot.lane.b32.xlu0 %v1339, 32
    %v1342 = vpop.permute.xlu0 %1341
    %1344 = vst.msk [vmem:[#allocation3 + $0x38] sm:$0xff] %vm67, %v1342
    %1346 = vrot.lane.b32.xlu0 %v1314, 32
    %v1347 = vpop.permute.xlu0 %1346
    %1349 = vrot.lane.b32.xlu0 %v1339, 64
    %v1350 = vpop.permute.xlu0 %1349
    %v1352 = vsel %vm67, %v1347, %v1350
    %v1354 = vsel %vm244, %v1352, 0
    %1356 = vmatprep.subr.mxu0 0.0
    %1357 = vmatpush1.msra.mxu0 0.0
    %1358 = vmatprep.subr.mxu0 0.0
    %1359 = vmatpush1.msra.mxu0 0.0
    %1360 = vmatprep.subr.mxu0 0.0
    %1361 = vmatpush1.msra.mxu0 0.0
    %1362 = vmatprep.subr.mxu0 0.0
    %1363 = vmatpush1.msra.mxu0 0.0
    %1364 = vmatprep.subr.mxu0 0.0
    %1365 = vmatpush1.msra.mxu0 0.0
    %1366 = vmatprep.subr.mxu0 0.0
    %1367 = vmatpush1.msra.mxu0 0.0
    %1368 = vmatprep.subr.mxu0 0.0
    %1369 = vmatpush1.msra.mxu0 0.0
    %1370 = vmatprep.subr.mxu0 0.0
    %1371 = vmatpush1.msra.mxu0 0.0
    %1372 = vmatprep.subr.mxu0 %v53
    %1373 = vmatpush1.msra.mxu0 %v52
    %1374 = vmatprep.subr.mxu0 %v51
    %1375 = vmatpush1.msra.mxu0 %v50
    %1376 = vmatprep.subr.mxu0 %v49
    %1377 = vmatpush1.msra.mxu0 %v48
    %1378 = vmatprep.subr.mxu0 %v47
    %1379 = vmatpush1.msra.mxu0 %v46
    %1380 = vmatprep.subr.mxu0 %v45
    %1381 = vmatpush1.msra.mxu0 %v44
    %1382 = vmatprep.subr.mxu0 %v43
    %1383 = vmatpush1.msra.mxu0 %v42
    %1384 = vmatprep.subr.mxu0 %v41
    %1385 = vmatpush1.msra.mxu0 %v40
    %1386 = vmatprep.subr.mxu0 %v39
    %1387 = vmatpush1.msra.mxu0 %v38
    %1388 = vmatprep.subr.mxu0 0.0
    %1389 = vmatpush2.msra.mxu0 0.0
    %1390 = vmatprep.subr.mxu0 0.0
    %1391 = vmatpush2.msra.mxu0 0.0
    %1392 = vmatprep.subr.mxu0 0.0
    %1393 = vmatpush2.msra.mxu0 0.0
    %1394 = vmatprep.subr.mxu0 0.0
    %1395 = vmatpush2.msra.mxu0 0.0
    %1396 = vmatprep.subr.mxu0 0.0
    %1397 = vmatpush2.msra.mxu0 0.0
    %1398 = vmatprep.subr.mxu0 0.0
    %1399 = vmatpush2.msra.mxu0 0.0
    %1400 = vmatprep.subr.mxu0 0.0
    %1401 = vmatpush2.msra.mxu0 0.0
    %1402 = vmatprep.subr.mxu0 0.0
    %1403 = vmatpush2.msra.mxu0 0.0
    %1404 = vmatprep.subr.mxu0 0.0
    %1405 = vmatpush2.msra.mxu0 0.0
    %1406 = vmatprep.subr.mxu0 0.0
    %1407 = vmatpush2.msra.mxu0 0.0
    %1408 = vmatprep.subr.mxu0 0.0
    %1409 = vmatpush2.msra.mxu0 0.0
    %1410 = vmatprep.subr.mxu0 0.0
    %1411 = vmatpush2.msra.mxu0 0.0
    %1412 = vmatprep.subr.mxu0 0.0
    %1413 = vmatpush2.msra.mxu0 0.0
    %1414 = vmatprep.subr.mxu0 0.0
    %1415 = vmatpush2.msra.mxu0 0.0
    %1416 = vmatprep.subr.mxu0 0.0
    %1417 = vmatpush2.msra.mxu0 0.0
    %1418 = vmatprep.subr.mxu0 0.0
    %1419 = vmatpush2.msra.mxu0 0.0
    %1420 = vmatprep.mubr.f32.mxu0 0.0
    %1421 = vmatmul.mubr.f32.gmra.mxu0 %v1354
    %v1422 = vpop.f32.mrf.mxu0
    %v1423 = vpop.f32.mrf.mxu0
    %v1424 = vadd.f32 0.0, %v1423
    %1425 = vdwg.mxu0
    %v1426 = vadd.f32 %v1424, %v348
    %v1427 = vxor.u32 %v1426, 2147483648
    %v1428 = vmul.f32 %v1427, 1.442695
    %v1429 = vpow.pop %v1428
    %v1430 = vadd.f32 %v1429, 1.0
    %v1431 = vrcp.pop %v1430
    %v1432 = vmul.f32 1.0, %v1431
    %v1433 = vtanh.pop %v1426
    %v1434 = vmul.f32 %v1432, %v1333
    %1436 = vrot.lane.b32.xlu0 %v1433, 64
    %v1437 = vpop.permute.xlu0 %1436
    %v1439 = vmul.f32 %v1432, %v1437
    %1441 = vrot.lane.b32.xlu0 %v1439, 32
    %v1442 = vpop.permute.xlu0 %1441
    %v1444 = vadd.f32 %v1434, %v1442
    %v1445 = vtanh.pop %v1444
    %1447 = vrot.lane.b32.xlu0 %v1445, 64
    %v1448 = vpop.permute.xlu0 %1447
    %v1450 = vmul.f32 %v1432, %v1448
    %1452 = vrot.lane.b32.xlu0 %v1450, 32
    %v1453 = vpop.permute.xlu0 %1452
    %1455 = vst.msk [vmem:[#allocation3 + $0x40] sm:$0xff] %vm67, %v1453
    %v1456 = vld [vmem:[#allocation3] sm:$0xff]
    %v1457 = vld [vmem:[#allocation3 + $0x8] sm:$0xff]
    %v1458 = vld [vmem:[#allocation3 + $0x10] sm:$0xff]
    %v1459 = vld [vmem:[#allocation3 + $0x18] sm:$0xff]
    %v1460 = vld [vmem:[#allocation3 + $0x20] sm:$0xff]
    %v1461 = vld [vmem:[#allocation3 + $0x28] sm:$0xff]
    %v1462 = vld [vmem:[#allocation3 + $0x30] sm:$0xff]
    %v1463 = vld [vmem:[#allocation3 + $0x38] sm:$0xff]
    %v1464 = vld [vmem:[#allocation3 + $0x40] sm:$0xff]
    %v1465 = vlaneseq
    %v1466 = vshrl.u32 %v1465, 7
    %v1467 = vsub.s32 2, %v1466
    %v1468 = vrot.slane %v37, %v1467
    %v1470 = vsel %vm67, %v1456, 0
    %v1473 = vsel %vm67, %v1457, 0
    %v1476 = vsel %vm67, %v1458, 0
    %v1479 = vsel %vm67, %v1459, 0
    %v1482 = vsel %vm67, %v1460, 0
    %v1485 = vsel %vm67, %v1461, 0
    %v1488 = vsel %vm67, %v1462, 0
    %v1491 = vsel %vm67, %v1463, 0
    %v1494 = vsel %vm67, %v1464, 0
    %1496 = vmatprep.subr.mxu0 0.0
    %1497 = vmatpush1.msra.mxu0 0.0
    %1498 = vmatprep.subr.mxu0 0.0
    %1499 = vmatpush1.msra.mxu0 0.0
    %1500 = vmatprep.subr.mxu0 0.0
    %1501 = vmatpush1.msra.mxu0 0.0
    %1502 = vmatprep.subr.mxu0 0.0
    %1503 = vmatpush1.msra.mxu0 0.0
    %1504 = vmatprep.subr.mxu0 0.0
    %1505 = vmatpush1.msra.mxu0 0.0
    %1506 = vmatprep.subr.mxu0 0.0
    %1507 = vmatpush1.msra.mxu0 0.0
    %1508 = vmatprep.subr.mxu0 0.0
    %1509 = vmatpush1.msra.mxu0 0.0
    %1510 = vmatprep.subr.mxu0 0.0
    %1511 = vmatpush1.msra.mxu0 0.0
    %1512 = vmatprep.subr.mxu0 0.0
    %1513 = vmatpush1.msra.mxu0 0.0
    %1514 = vmatprep.subr.mxu0 0.0
    %1515 = vmatpush1.msra.mxu0 0.0
    %1516 = vmatprep.subr.mxu0 0.0
    %1517 = vmatpush1.msra.mxu0 0.0
    %1518 = vmatprep.subr.mxu0 0.0
    %1519 = vmatpush1.msra.mxu0 0.0
    %1520 = vmatprep.subr.mxu0 0.0
    %1521 = vmatpush1.msra.mxu0 %v36
    %1522 = vmatprep.subr.mxu0 0.0
    %1523 = vmatpush1.msra.mxu0 %v35
    %1524 = vmatprep.subr.mxu0 0.0
    %1525 = vmatpush1.msra.mxu0 %v34
    %1526 = vmatprep.subr.mxu0 0.0
    %1527 = vmatpush1.msra.mxu0 %v33
    %1528 = vmatprep.subr.mxu0 0.0
    %1529 = vmatpush2.msra.mxu0 0.0
    %1530 = vmatprep.subr.mxu0 0.0
    %1531 = vmatpush2.msra.mxu0 0.0
    %1532 = vmatprep.subr.mxu0 0.0
    %1533 = vmatpush2.msra.mxu0 0.0
    %1534 = vmatprep.subr.mxu0 0.0
    %1535 = vmatpush2.msra.mxu0 0.0
    %1536 = vmatprep.subr.mxu0 0.0
    %1537 = vmatpush2.msra.mxu0 0.0
    %1538 = vmatprep.subr.mxu0 0.0
    %1539 = vmatpush2.msra.mxu0 0.0
    %1540 = vmatprep.subr.mxu0 0.0
    %1541 = vmatpush2.msra.mxu0 0.0
    %1542 = vmatprep.subr.mxu0 0.0
    %1543 = vmatpush2.msra.mxu0 0.0
    %1544 = vmatprep.subr.mxu0 0.0
    %1545 = vmatpush2.msra.mxu0 0.0
    %1546 = vmatprep.subr.mxu0 0.0
    %1547 = vmatpush2.msra.mxu0 0.0
    %1548 = vmatprep.subr.mxu0 0.0
    %1549 = vmatpush2.msra.mxu0 0.0
    %1550 = vmatprep.subr.mxu0 0.0
    %1551 = vmatpush2.msra.mxu0 0.0
    %1552 = vmatprep.subr.mxu0 0.0
    %1553 = vmatpush2.msra.mxu0 0.0
    %1554 = vmatprep.subr.mxu0 0.0
    %1555 = vmatpush2.msra.mxu0 0.0
    %1556 = vmatprep.subr.mxu0 0.0
    %1557 = vmatpush2.msra.mxu0 0.0
    %1558 = vmatprep.subr.mxu0 0.0
    %1559 = vmatpush2.msra.mxu0 0.0
    %1560 = vmatprep.mubr.f32.mxu0 0.0
    %1561 = vmatmul.mubr.f32.gmra.mxu0 %v1470
    %v1562 = vpop.f32.mrf.mxu0
    %v1563 = vadd.f32 %v1468, %v1562
    %v1564 = vpop.f32.mrf.mxu0
    %1565 = vmatprep.mubr.f32.mxu0 0.0
    %1566 = vmatmul.mubr.f32.gmra.mxu0 %v1473
    %v1567 = vpop.f32.mrf.mxu0
    %v1568 = vadd.f32 %v1468, %v1567
    %v1569 = vpop.f32.mrf.mxu0
    %1570 = vmatprep.mubr.f32.mxu0 0.0
    %1571 = vmatmul.mubr.f32.gmra.mxu0 %v1476
    %v1572 = vpop.f32.mrf.mxu0
    %v1573 = vadd.f32 %v1468, %v1572
    %v1574 = vpop.f32.mrf.mxu0
    %1575 = vmatprep.mubr.f32.mxu0 0.0
    %1576 = vmatmul.mubr.f32.gmra.mxu0 %v1479
    %v1577 = vpop.f32.mrf.mxu0
    %v1578 = vadd.f32 %v1468, %v1577
    %v1579 = vpop.f32.mrf.mxu0
    %1580 = vmatprep.mubr.f32.mxu0 0.0
    %1581 = vmatmul.mubr.f32.gmra.mxu0 %v1482
    %v1582 = vpop.f32.mrf.mxu0
    %v1583 = vadd.f32 %v1468, %v1582
    %v1584 = vpop.f32.mrf.mxu0
    %1585 = vmatprep.mubr.f32.mxu0 0.0
    %1586 = vmatmul.mubr.f32.gmra.mxu0 %v1485
    %v1587 = vpop.f32.mrf.mxu0
    %v1588 = vadd.f32 %v1468, %v1587
    %v1589 = vpop.f32.mrf.mxu0
    %1590 = vmatprep.mubr.f32.mxu0 0.0
    %1591 = vmatmul.mubr.f32.gmra.mxu0 %v1488
    %v1592 = vpop.f32.mrf.mxu0
    %v1593 = vadd.f32 %v1468, %v1592
    %v1594 = vpop.f32.mrf.mxu0
    %1595 = vmatprep.mubr.f32.mxu0 0.0
    %1596 = vmatmul.mubr.f32.gmra.mxu0 %v1491
    %v1597 = vpop.f32.mrf.mxu0
    %v1598 = vadd.f32 %v1468, %v1597
    %v1599 = vpop.f32.mrf.mxu0
    %1600 = vmatprep.mubr.f32.mxu0 0.0
    %1601 = vmatmul.mubr.f32.gmra.mxu0 %v1494
    %v1602 = vpop.f32.mrf.mxu0
    %v1603 = vadd.f32 %v1468, %v1602
    %v1604 = vpop.f32.mrf.mxu0
    %1605 = vdwg.mxu0
    %1606 = vst [vmem:[#allocation7] sm:$0xff] %v1563
    %1607 = vst [vmem:[#allocation7 + $0x8] sm:$0xff] %v1568
    %1608 = vst [vmem:[#allocation7 + $0x10] sm:$0xff] %v1573
    %1609 = vst [vmem:[#allocation7 + $0x18] sm:$0xff] %v1578
    %1610 = vst [vmem:[#allocation7 + $0x20] sm:$0xff] %v1583
    %1611 = vst [vmem:[#allocation7 + $0x28] sm:$0xff] %v1588
    %1612 = vst [vmem:[#allocation7 + $0x30] sm:$0xff] %v1593
    %1613 = vst [vmem:[#allocation7 + $0x38] sm:$0xff] %v1598
    %1614 = vst [vmem:[#allocation7 + $0x40] sm:$0xff] %v1603
    // Predicated region
    $region18: #{tpu_custom_call.1} parent=1 // pred_check
      _
    $region19: #{tpu_custom_call.1} parent=1 // pred_check_branch
      %1616 = sbr.rel (0) target = $region21
    $region20: #{tpu_custom_call.1} parent=1 // pred_region
      %s1618 = ssub.s32 1152, 1152
      %1619 = vsyncadd [#allocation6], %s1618
      %s1620 = sshll.u32 [#allocation7], 4
      %s1621 = int_to_ptr.vmem [resolvable:$true] %s1620
      %1626 = dma.vmem_to_hbm [thread:$0]  %s1621, 1152, %s3, [#allocation6], 128, 128, 8
    $region21: #{tpu_custom_call.1} parent=1 // pred_fallthru
      _
    // Predicated region
    $region22: #{tpu_custom_call.1} parent=1 // pred_check
      _
    $region23: #{tpu_custom_call.1} parent=1 // pred_check_branch
      %1628 = sbr.rel (0) target = $region25
    $region24: #{tpu_custom_call.1} parent=1 // pred_region
      %1629 = dma.done [#allocation6], 1152
    $region25: #{tpu_custom_call.1} parent=1 // pred_fallthru
      _
    %1630 = vsyncpa [#allocation5], 1
    %1631 = vsyncpa [#allocation6], 1

</llo_original>
